<compile_context>
chip_gen: v7x
topology: tpu7x:2x2x1
jax: 0.10.0
libtpu: 0.0.40
codegen_flags: <defaults>
</compile_context>

<pallas_src>
import functools
import math

import jax
import jax.numpy as jnp
from jax.experimental import pallas as pl
from jax.experimental.pallas import tpu as pltpu


def _round_up(x, m):
    return (x + m - 1) // m * m


def _pick_tiles(Mp, Np):
    """Weight-streaming regime: full-K tile, lane-dense N tile.

    Prefer >=2 N blocks when Np >= 256 so v7x's two TensorCores each stream a
    disjoint half of the weight; fall back to splitting M when N has only one
    block and the split stays 8-aligned.
    """
    if Np >= 1024 and Np % 512 == 0:
        tn = 512
    elif Np >= 512 and Np % 256 == 0:
        tn = 256
    elif Np >= 256 and Np % 128 == 0:
        tn = 128
    else:
        tn = Np
    tm = Mp
    if Np == tn and Mp >= 256 and (Mp // 2) % 8 == 0:
        tm = Mp // 2
    return tm, tn


_MM_COMPILER_PARAMS = pltpu.CompilerParams(
    dimension_semantics=("parallel", "parallel"),
    vmem_limit_bytes=32 << 20)


# ----------------------------------------------------------------------------
# Fused conv-as-matmul kernels: out = act(A @ W + bias [+ residual])
# (BN scale is pre-folded into W; single K step -> no accumulator scratch)
# ----------------------------------------------------------------------------

def _mm_bias_kernel(a_ref, w_ref, b_ref, o_ref, *, relu):
    y = jnp.dot(a_ref[...], w_ref[...], preferred_element_type=jnp.float32)
    y = y + b_ref[...]
    if relu:
        y = jnp.maximum(y, 0.0)
    o_ref[...] = y.astype(o_ref.dtype)


def _mm_bias_res_kernel(a_ref, w_ref, b_ref, r_ref, o_ref):
    y = jnp.dot(a_ref[...], w_ref[...], preferred_element_type=jnp.float32)
    y = y + b_ref[...] + r_ref[...].astype(jnp.float32)
    o_ref[...] = jnp.maximum(y, 0.0).astype(o_ref.dtype)


@functools.partial(jax.jit, static_argnames=("relu", "out_dtype"))
def _fused_matmul(a, w, b, *, relu, out_dtype=jnp.bfloat16):
    """[M,K] bf16 @ pre-packed bf16 [Kp,Np] with fused bias(+ReLU) epilogue."""
    M, K = a.shape
    Kp, Np = w.shape
    Mp = _round_up(M, 8)
    if (Mp, Kp) != (M, K):
        a = jnp.pad(a, ((0, Mp - M), (0, Kp - K)))
    tm, tn = _pick_tiles(Mp, Np)
    out = pl.pallas_call(
        functools.partial(_mm_bias_kernel, relu=relu),
        out_shape=jax.ShapeDtypeStruct((Mp, Np), out_dtype),
        grid_spec=pltpu.PrefetchScalarGridSpec(
            num_scalar_prefetch=0,
            grid=(Mp // tm, Np // tn),
            in_specs=[pl.BlockSpec((tm, Kp), lambda i, j: (i, 0)),
                      pl.BlockSpec((Kp, tn), lambda i, j: (0, j)),
                      pl.BlockSpec((1, tn), lambda i, j: (0, j))],
            out_specs=pl.BlockSpec((tm, tn), lambda i, j: (i, j))),
        compiler_params=_MM_COMPILER_PARAMS,
    )(a, w, b)
    return out[:M] if Mp != M else out


@jax.jit
def _fused_matmul_res(a, w, b, r):
    """Same as _fused_matmul but with fused residual add + ReLU epilogue."""
    M, K = a.shape
    Kp, Np = w.shape
    Mp = _round_up(M, 8)
    if (Mp, Kp) != (M, K):
        a = jnp.pad(a, ((0, Mp - M), (0, Kp - K)))
    if Mp != M:
        r = jnp.pad(r, ((0, Mp - M), (0, 0)))
    tm, tn = _pick_tiles(Mp, Np)
    out = pl.pallas_call(
        _mm_bias_res_kernel,
        out_shape=jax.ShapeDtypeStruct((Mp, Np), jnp.bfloat16),
        grid_spec=pltpu.PrefetchScalarGridSpec(
            num_scalar_prefetch=0,
            grid=(Mp // tm, Np // tn),
            in_specs=[pl.BlockSpec((tm, Kp), lambda i, j: (i, 0)),
                      pl.BlockSpec((Kp, tn), lambda i, j: (0, j)),
                      pl.BlockSpec((1, tn), lambda i, j: (0, j)),
                      pl.BlockSpec((tm, tn), lambda i, j: (i, j))],
            out_specs=pl.BlockSpec((tm, tn), lambda i, j: (i, j))),
        compiler_params=_MM_COMPILER_PARAMS,
    )(a, w, b, r)
    return out[:M] if Mp != M else out


# ----------------------------------------------------------------------------
# Pooling: accumulate over k*k taps on an "arbitrary" grid axis (f32 scratch);
# scale by 1/taps only at the final store.
# ----------------------------------------------------------------------------

def _pool_kernel(x_ref, o_ref, acc_ref, *, op, inv_taps):
    t = pl.program_id(0)
    x = x_ref[0].astype(jnp.float32)                  # [M, C], C on lanes

    @pl.when(t == 0)
    def _init():
        acc_ref[...] = x

    @pl.when(t != 0)
    def _acc():
        if op == "max":
            acc_ref[...] = jnp.maximum(acc_ref[...], x)
        else:
            acc_ref[...] = acc_ref[...] + x

    @pl.when(t == pl.num_programs(0) - 1)
    def _store():
        r = acc_ref[...]
        if op == "mean":
            r = r * inv_taps
        o_ref[...] = r.astype(o_ref.dtype)


@functools.partial(jax.jit, static_argnames=("op",))
def _pool_taps(stacked, *, op):
    T, M, C = stacked.shape
    return pl.pallas_call(
        functools.partial(_pool_kernel, op=op, inv_taps=1.0 / T),
        out_shape=jax.ShapeDtypeStruct((M, C), jnp.bfloat16),
        grid_spec=pltpu.PrefetchScalarGridSpec(
            num_scalar_prefetch=0,
            grid=(T,),
            in_specs=[pl.BlockSpec((1, M, C), lambda t: (t, 0, 0))],
            out_specs=pl.BlockSpec((M, C), lambda t: (0, 0)),
            scratch_shapes=[pltpu.VMEM((M, C), jnp.float32)]),
        compiler_params=pltpu.CompilerParams(
            dimension_semantics=("arbitrary",)),
    )(stacked)


# ----------------------------------------------------------------------------
# Fused CoT tail: att2 1x1 conv + spatial softmax + (k1 + p*v), per batch slab
# ----------------------------------------------------------------------------

def _cot_tail_kernel(a1_ref, w_ref, b_ref, v_ref, k1_ref, o_ref):
    s = jnp.dot(a1_ref[0], w_ref[...], preferred_element_type=jnp.float32)
    s = s + b_ref[...]                                 # [HW, C]
    m = jnp.max(s, axis=0, keepdims=True)
    e = jnp.exp(s - m)
    p = e * pl.reciprocal(jnp.sum(e, axis=0, keepdims=True), approx=True)
    out = k1_ref[0].astype(jnp.float32) + p * v_ref[0].astype(jnp.float32)
    o_ref[0] = out.astype(o_ref.dtype)


@jax.jit
def cot_tail(a1, w, b, v, k1):
    B, HW, Kp = a1.shape
    _, Cp = w.shape
    spec_c = pl.BlockSpec((1, HW, Cp), lambda bb: (bb, 0, 0))
    return pl.pallas_call(
        _cot_tail_kernel,
        out_shape=jax.ShapeDtypeStruct((B, HW, Cp), jnp.bfloat16),
        grid_spec=pltpu.PrefetchScalarGridSpec(
            num_scalar_prefetch=0,
            grid=(B,),
            in_specs=[pl.BlockSpec((1, HW, Kp), lambda bb: (bb, 0, 0)),
                      pl.BlockSpec((Kp, Cp), lambda bb: (0, 0)),
                      pl.BlockSpec((1, Cp), lambda bb: (0, 0)),
                      spec_c, spec_c],
            out_specs=spec_c),
        compiler_params=pltpu.CompilerParams(
            dimension_semantics=("parallel",),
            vmem_limit_bytes=32 << 20),
    )(a1, w, b, v, k1)


# ----------------------------------------------------------------------------
# Global average pool (lane-dense over C)
# ----------------------------------------------------------------------------

def _gap_kernel(x_ref, o_ref):
    x = x_ref[...].astype(jnp.float32)                 # [B, HW, C]
    o_ref[...] = (jnp.sum(x, axis=1) * (1.0 / x.shape[1])).astype(o_ref.dtype)


@jax.jit
def global_avg_pool(x3d):
    B, HW, C = x3d.shape
    return pl.pallas_call(
        _gap_kernel,
        out_shape=jax.ShapeDtypeStruct((B, C), jnp.bfloat16))(x3d)


# ----------------------------------------------------------------------------
# Layer helpers (glue = reshape / pad / slice; all compute in Pallas kernels)
# ----------------------------------------------------------------------------

def _im2col(x, kh, kw, stride, pad):
    B, H, W, C = x.shape
    xp = jnp.pad(x, ((0, 0), (pad, pad), (pad, pad), (0, 0)))
    Ho = (H + 2 * pad - kh) // stride + 1
    Wo = (W + 2 * pad - kw) // stride + 1
    cols = []
    for di in range(kh):
        for dj in range(kw):
            cols.append(xp[:, di:di + stride * (Ho - 1) + 1:stride,
                           dj:dj + stride * (Wo - 1) + 1:stride, :])
    return jnp.concatenate(cols, axis=-1), Ho, Wo      # [B,Ho,Wo,kh*kw*C]


def conv_bn(x, p, *, relu=False, residual=None):
    """conv (+folded BN) (+ReLU) (+residual add + ReLU), one fused matmul."""
    B, H, W, _ = x.shape
    kh, kw, stride, pad = p["kh"], p["kw"], p["stride"], p["pad"]
    if kh == 1 and kw == 1 and stride == 1 and pad == 0:
        patches, Ho, Wo = x, H, W
    else:
        patches, Ho, Wo = _im2col(x, kh, kw, stride, pad)
    a = patches.reshape(B * Ho * Wo, -1)
    if residual is not None:
        r = residual.reshape(B * Ho * Wo, p["Np"])
        out = _fused_matmul_res(a, p["w"], p["bias"], r)
    else:
        out = _fused_matmul(a, p["w"], p["bias"], relu=relu)
    return out.reshape(B, Ho, Wo, p["Np"])


def pool2d(x, op, ksize=3, stride=2, pad=1):
    B, H, W, C = x.shape
    pad_val = float(jnp.finfo(jnp.bfloat16).min) if op == "max" else 0.0
    xp = jnp.pad(x, ((0, 0), (pad, pad), (pad, pad), (0, 0)),
                 constant_values=pad_val)
    Ho = (H + 2 * pad - ksize) // stride + 1
    Wo = (W + 2 * pad - ksize) // stride + 1
    slices = []
    for di in range(ksize):
        for dj in range(ksize):
            slices.append(xp[:, di:di + stride * (Ho - 1) + 1:stride,
                             dj:dj + stride * (Wo - 1) + 1:stride, :])
    stacked = jnp.stack(slices, axis=0).reshape(ksize * ksize, B * Ho * Wo, C)
    return _pool_taps(stacked, op=op).reshape(B, Ho, Wo, C)


def cot_layer(x, p):
    """Simplified Contextual-Transformer block (kernel_size=3)."""
    B, H, W, Cp = x.shape
    k1 = conv_bn(x, p["key"], relu=True)       # grouped 3x3 via block-diag W
    v = conv_bn(x, p["val"])                   # 1x1 + BN
    y = jnp.concatenate([k1, x], axis=-1)      # [B,H,W,2*Cp]
    a1 = conv_bn(y, p["att1"], relu=True)
    HW = H * W
    # att2 1x1 conv (9-tap mean pre-folded) + softmax + combine, fused.
    out = cot_tail(a1.reshape(B, HW, -1), p["att2"]["w"], p["att2"]["bias"],
                   v.reshape(B, HW, Cp), k1.reshape(B, HW, Cp))
    return out.reshape(B, H, W, Cp)


def bottleneck(x, p):
    identity = x
    out = conv_bn(x, p["conv1"], relu=True)
    out = cot_layer(out, p["cot"])
    if p["stride"] == 2:
        out = pool2d(out, "mean", 3, 2, 1)     # CoTNet-style avg-pool stride
    if p["down"] is not None:
        if p["stride"] == 2:
            identity = pool2d(identity, "mean", 3, 2, 1)
        identity = conv_bn(identity, p["down"])
    # conv3 + BN + residual add + ReLU fused into a single matmul epilogue
    return conv_bn(out, p["conv3"], residual=identity)


# ----------------------------------------------------------------------------
# Deterministic parameter construction (synthetic weights, pre-packed bf16,
# BN scale folded into weight columns, channel padding baked in)
# ----------------------------------------------------------------------------

_KEY = jax.random.PRNGKey(0)
_COUNTER = [0]


def _next_key():
    _COUNTER[0] += 1
    return jax.random.fold_in(_KEY, _COUNTER[0])


def _conv_w(kh, kw, cin, cout):
    std = 1.0 / math.sqrt(kh * kw * cin)
    return jax.random.normal(_next_key(), (kh, kw, cin, cout), jnp.float32) * std


def _bn_vals(c, eps=1e-5):
    gamma = jax.random.uniform(_next_key(), (c,), jnp.float32, 0.5, 1.5)
    beta = jax.random.normal(_next_key(), (c,), jnp.float32) * 0.1
    running_mean = jnp.zeros((c,), jnp.float32)
    running_var = jnp.ones((c,), jnp.float32)
    scale = gamma / jnp.sqrt(running_var + eps)
    bias = beta - running_mean * scale
    return scale, bias


def _pack_conv(w3, scale, bias, *, cinp, kh, kw, stride, pad):
    """Pack [T, Cin, Cout] weight segments into bf16 [T*cinp (->128-mult), Np].

    BN scale is folded into the weight (in f32, before the bf16 cast); the
    channel-padded input layout (cinp per tap/segment) is baked into the rows.
    """
    T, Cin, Cout = w3.shape
    Np = _round_up(Cout, 128)
    w3 = w3 * scale[None, None, :].astype(jnp.float32)
    wp = jnp.zeros((T, cinp, Np), jnp.float32).at[:, :Cin, :Cout].set(w3)
    wp = wp.reshape(T * cinp, Np)
    Kp = _round_up(T * cinp, 128)
    if Kp != T * cinp:
        wp = jnp.pad(wp, ((0, Kp - T * cinp), (0, 0)))
    bp = jnp.zeros((1, Np), jnp.float32).at[0, :Cout].set(bias)
    return dict(w=wp.astype(jnp.bfloat16), bias=bp, N=Cout, Np=Np,
                kh=kh, kw=kw, stride=stride, pad=pad)


def _conv_bn_p(kh, kw, cin, cout, *, cinp=None, stride=1, pad=0):
    if cinp is None:
        cinp = _round_up(cin, 128)
    w3 = _conv_w(kh, kw, cin, cout).reshape(kh * kw, cin, cout)
    scale, bias = _bn_vals(cout)
    return _pack_conv(w3, scale, bias, cinp=cinp, kh=kh, kw=kw,
                      stride=stride, pad=pad)


def _cot_key_weight(d, groups=4):
    """Per-tap block-diagonal [9, d, d] weight equivalent to a grouped 3x3 conv."""
    cg = d // groups
    w = jnp.zeros((9, d, d), jnp.float32)
    for g in range(groups):
        wg = _conv_w(3, 3, cg, cg).reshape(9, cg, cg)
        w = w.at[:, g * cg:(g + 1) * cg, g * cg:(g + 1) * cg].set(wg)
    return w


def _cot_p(d):
    dp = _round_up(d, 128)
    key_scale, key_bias = _bn_vals(d)
    key = _pack_conv(_cot_key_weight(d), key_scale, key_bias,
                     cinp=dp, kh=3, kw=3, stride=1, pad=1)
    val = _conv_bn_p(1, 1, d, d)
    # att1: 1x1 conv over concat([k1, x]) -> d/2 channels (+BN+ReLU).
    # Two input segments of width d, each channel-padded to dp.
    w1 = _conv_w(1, 1, 2 * d, d // 2).reshape(2, d, d // 2)
    s1, b1 = _bn_vals(d // 2)
    att1 = _pack_conv(w1, s1, b1, cinp=dp, kh=1, kw=1, stride=1, pad=0)
    # att2: 1x1 conv producing k*k (=9) maps per channel; the downstream mean
    # over the 9 taps is linear -> fold it into the weight / bias once.
    w2 = _conv_w(1, 1, d // 2, 9 * d).reshape(d // 2, 9 * d)
    b2 = jax.random.normal(_next_key(), (9 * d,), jnp.float32) * 0.01
    w2f = w2.reshape(d // 2, d, 9).mean(axis=-1).reshape(1, d // 2, d)
    b2f = b2.reshape(d, 9).mean(axis=-1)
    att2 = _pack_conv(w2f, jnp.ones((d,), jnp.float32), b2f,
                      cinp=_round_up(d // 2, 128), kh=1, kw=1, stride=1, pad=0)
    return dict(key=key, val=val, att1=att1, att2=att2)


def make_params(num_classes=1000):
    # Stem input keeps its raw 3 channels (no channel padding at the network
    # input); everything downstream is channel-padded to 128 multiples.
    params = dict(stem=_conv_bn_p(7, 7, 3, 64, cinp=3, stride=2, pad=3),
                  stages=[])
    widths, blocks, expansion = (64, 128, 256, 512), (3, 4, 6, 3), 4
    in_ch = 64
    for si, (w, nb) in enumerate(zip(widths, blocks)):
        stage = []
        for bi in range(nb):
            stride = 2 if (si > 0 and bi == 0) else 1
            out_ch = w * expansion
            blk = dict(
                stride=stride,
                conv1=_conv_bn_p(1, 1, in_ch, w),
                cot=_cot_p(w),
                conv3=_conv_bn_p(1, 1, w, out_ch),
                down=None)
            if bi == 0:
                blk["down"] = _conv_bn_p(1, 1, in_ch, out_ch)
            stage.append(blk)
            in_ch = out_ch
        params["stages"].append(stage)
    fc_w = _conv_w(1, 1, 512 * expansion, num_classes).reshape(
        1, 512 * expansion, num_classes)
    params["fc"] = _pack_conv(fc_w, jnp.ones((num_classes,), jnp.float32),
                              jnp.zeros((num_classes,), jnp.float32),
                              cinp=512 * expansion, kh=1, kw=1, stride=1, pad=0)
    return params


# ----------------------------------------------------------------------------
# Full forward pass
# ----------------------------------------------------------------------------

def cotnet50_forward(x_nchw, params):
    # NCHW -> NHWC, bf16 activations throughout (f32 accumulation in-kernel).
    x = jnp.transpose(x_nchw, (0, 2, 3, 1)).astype(jnp.bfloat16)
    # nn.Upsample(scale_factor=7), mode='nearest' (pure data movement -> glue)
    x = jnp.repeat(jnp.repeat(x, 7, axis=1), 7, axis=2)
    # stem: 7x7/s2 conv + BN + ReLU (fused) + 3x3/s2 max pool
    x = conv_bn(x, params["stem"], relu=True)
    x = pool2d(x, "max", 3, 2, 1)
    # 4 stages of CoT bottleneck blocks
    for stage in params["stages"]:
        for blk in stage:
            x = bottleneck(x, blk)
    # global average pool + fc (fused bias), logits in f32
    B, H, W, Cp = x.shape
    feat = global_avg_pool(x.reshape(B, H * W, Cp))        # [B, 2048] bf16
    fc = params["fc"]
    logits = _fused_matmul(feat, fc["w"], fc["bias"], relu=False,
                           out_dtype=jnp.float32)
    return logits[:, :fc["N"]]


if __name__ == "__main__":
    key = jax.random.PRNGKey(0)
    # Small NCHW input (3 channels, as expected by the CoTNet-50 stem).
    x = jax.random.normal(key, (2, 3, 8, 8), jnp.float32)
    params = make_params()
    out = cotnet50_forward(x, params)
    out = jax.block_until_ready(out)
    assert out.shape == (2, 1000), out.shape
    assert bool(jnp.all(jnp.isfinite(out)))
    print("KERNEL_OK")
</pallas_src>

<mosaic_0001>
module attributes {stable_mosaic.version = 11 : i64} {
  func.func @_mm_bias_kernel(%arg0: i32, %arg1: i32, %arg2: memref<784x256xbf16, #tpu.memory_space<vmem>>, %arg3: memref<256x128xbf16, #tpu.memory_space<vmem>>, %arg4: memref<1x128xf32, #tpu.memory_space<vmem>>, %arg5: memref<784x128xbf16, #tpu.memory_space<vmem>>) attributes {dimension_semantics = [#tpu.dimension_semantics<parallel>, #tpu.dimension_semantics<parallel>], iteration_bounds = array<i64: 2, 1>, scalar_prefetch = 0 : i64, scratch_operands = 0 : i64, tpu.core_type = #tpu.core_type<tc>, window_params = [{transform_indices = @transform_0, window_bounds = array<i64: 784, 256>}, {transform_indices = @transform_1, window_bounds = array<i64: 256, 128>}, {transform_indices = @transform_2, window_bounds = array<i64: 1, 128>}, {transform_indices = @transform_3, window_bounds = array<i64: 784, 128>}]} {
    %c0 = arith.constant 0 : index
    %c0_0 = arith.constant 0 : index
    %0 = vector.load %arg2[%c0, %c0_0] : memref<784x256xbf16, #tpu.memory_space<vmem>>, vector<784x256xbf16>
    %c0_1 = arith.constant 0 : index
    %c0_2 = arith.constant 0 : index
    %1 = vector.load %arg3[%c0_1, %c0_2] : memref<256x128xbf16, #tpu.memory_space<vmem>>, vector<256x128xbf16>
    %cst = arith.constant dense<0.000000e+00> : vector<784x128xf32>
    %2 = tpu.matmul %0, %1, %cst {dimension_numbers = #tpu.dot_dimension_numbers<[1], [0], [0], [1], [0, 0, 1, 1], [], []>} : vector<784x256xbf16>, vector<256x128xbf16>, vector<784x128xf32> -> vector<784x128xf32>
    %c0_3 = arith.constant 0 : index
    %c0_4 = arith.constant 0 : index
    %3 = vector.load %arg4[%c0_3, %c0_4] : memref<1x128xf32, #tpu.memory_space<vmem>>, vector<1x128xf32>
    %4 = vector.broadcast %3 : vector<1x128xf32> to vector<784x128xf32>
    %5 = arith.addf %2, %4 : vector<784x128xf32>
    %cst_5 = arith.constant 0.000000e+00 : f32
    %6 = vector.broadcast %cst_5 : f32 to vector<784x128xf32>
    %7 = arith.maximumf %5, %6 : vector<784x128xf32>
    %8 = arith.truncf %7 : vector<784x128xf32> to vector<784x128xbf16>
    %c0_6 = arith.constant 0 : index
    %c0_7 = arith.constant 0 : index
    %9 = vector.load %arg5[%c0_6, %c0_7] : memref<784x128xbf16, #tpu.memory_space<vmem>>, vector<784x128xbf16>
    tpu.vector_store %arg5[%c0_6, %c0_7], %8 {strides = array<i32>} : memref<784x128xbf16, #tpu.memory_space<vmem>>, vector<784x128xbf16>,
    return
  }
  func.func @transform_0(%arg0: i32, %arg1: i32) -> (i32, i32) {
    %c0_i32 = arith.constant 0 : i32
    %c0_i32_0 = arith.constant 0 : i32
    return %arg0, %c0_i32 : i32, i32
  }
  func.func @transform_1(%arg0: i32, %arg1: i32) -> (i32, i32) {
    %c0_i32 = arith.constant 0 : i32
    %c0_i32_0 = arith.constant 0 : i32
    return %c0_i32, %arg1 : i32, i32
  }
  func.func @transform_2(%arg0: i32, %arg1: i32) -> (i32, i32) {
    %c0_i32 = arith.constant 0 : i32
    %c0_i32_0 = arith.constant 0 : i32
    return %c0_i32, %arg1 : i32, i32
  }
  func.func @transform_3(%arg0: i32, %arg1: i32) -> (i32, i32) {
    %c0_i32 = arith.constant 0 : i32
    return %arg0, %arg1 : i32, i32
  }
}

</mosaic_0001>

<llo_original>
// kernel: _fused_matmul.1
$region0: #{_fused_matmul.1}
  #allocation0 [shape = 'u32[]', space=smem, size = 0x4, offset = 0x4, fixed_abs, tag = 'smem constant byte address 0x4 - core index']
  #allocation1 [shape = 'u32[144,128]{1,0:T(1,128)}', space=vmem, size = 0x12000, scoped, tag = 'internal scratch']
  %s0 = inlined_call_operand.vmem [shape: bf16[1568,256], index: 0, kind: input, shape index: {}]
  %s1 = inlined_call_operand.vmem [shape: bf16[256,128], index: 1, kind: input, shape index: {}]
  %s2 = inlined_call_operand.vmem [shape: f32[1,128], index: 2, kind: input, shape index: {}]
  %s3 = inlined_call_operand.hbm [shape: bf16[1568,128], index: 3, kind: output, shape index: {}]
  %s4 = sld [smem:[#allocation0]]
  $region45: #{_fused_matmul.1} parent=0
    _
  %s6 = ssub.s32 1, %s4
  %s7 = scalar_select 0, %s6, %s4
  $region1: #{_fused_matmul.1} parent=0
    #allocation2 [shape = 'u8[401408]{0}', space=vmem, size = 0x62000, scoped, tag = 'output window, operand 0']
    #allocation3 [shape = 's32[2]{0}', space=sflag, size = 0x8, scoped, tag = 'scoped memory for _fused_matmul.1']
    %8 = vsyncpa [#allocation3], 0
    %s9 = scalar_lea.sflag [#allocation3], 1
    %10 = vsyncpa %s9, 0
    loop: start=0, step=1, limit=4
    $region2: #{_fused_matmul.1} parent=1 // loop_pre_header
      _
    $region3: #{_fused_matmul.1} parent=1 // loop_header
      %s12 = sphi 0, %s16
      %p13 = scmp.ge.s32.totalorder %s12, 4
      %s19 = sphi 0, %s31
      %s20 = sphi 0, %s27
      %s21 = sphi 0, %s19
      %s22 = sphi 0, %s20
      %s23 = sphi 0, %s21
      %s24 = sphi 0, %s22
      %s34 = sphi 0, %s36
      %s37 = sphi 0, %s34
      %s38 = sphi 0, %s37
      %s54 = sphi 0, %s38
      %s60 = sphi 0, %s62
      %s63 = sphi 0, %s60
      %s64 = sphi 0, %s63
      %s80 = sphi 0, %s64
      %s86 = sphi 0, %s88
      %s89 = sphi 0, %s86
      %s90 = sphi 0, %s89
      %s106 = sphi 0, %s90
      %s114 = sphi 0, %s116
      %s117 = sphi 0, %s114
      %s118 = sphi 0, %s117
      %s134 = sphi 0, %s118
    $region4: #{_fused_matmul.1} parent=1 // loop_header_branch
      %15 = sbr.rel (%p13) target = $region8
    $region5: #{_fused_matmul.1} parent=1 // loop_body
      %s17 = ssub.s32 %s12, 1
      %s18 = ssub.s32 %s12, 2
      %s25 = sadd.s32 1, %s20
      %p26 = scmp.ge.s32.totalorder %s25, 1
      %s27 = scalar_select %p26, 0, %s25
      %s28 = sadd.s32 1, %s19
      %s29 = scalar_select %p26, %s28, %s19
      %p30 = scmp.ge.s32.totalorder %s29, 2
      %s31 = scalar_select %p30, 0, %s29
      %s32 = ssub.s32 %s19, %s31
      %p33 = scmp.eq.s32.totalorder %s32, 0
      %s35 = sadd.s32 %s34, 1
      %s36 = scalar_select %p33, %s34, %s35
      %p39 = pneg %p33
      %p40 = scmp.eq.s32.totalorder %s12, 1
      %p41 = por %p39, %p40
      %p42 = scmp.ne.s32.totalorder %s34, %s37
      %p43 = scmp.eq.s32.totalorder %s12, 0
      %p44 = por %p42, %p43
      %p45 = scmp.ne.s32.totalorder %s34, %s37
      %p46 = scmp.eq.s32.totalorder %s17, 1
      %p47 = por %p45, %p46
      %p48 = scmp.ne.s32.totalorder %s37, %s38
      %p49 = scmp.eq.s32.totalorder %s17, 0
      %p50 = por %p48, %p49
      %p51 = scmp.ne.s32.totalorder %s37, %s38
      %p52 = scmp.eq.s32.totalorder %s18, 1
      %p53 = por %p51, %p52
      %p55 = scmp.ne.s32.totalorder %s38, %s54
      %p56 = scmp.eq.s32.totalorder %s18, 0
      %p57 = por %p55, %p56
      %s58 = ssub.s32 %s20, %s27
      %p59 = scmp.eq.s32.totalorder %s58, 0
      %s61 = sadd.s32 %s60, 1
      %s62 = scalar_select %p59, %s60, %s61
      %p65 = pneg %p59
      %p66 = scmp.eq.s32.totalorder %s12, 1
      %p67 = por %p65, %p66
      %p68 = scmp.ne.s32.totalorder %s60, %s63
      %p69 = scmp.eq.s32.totalorder %s12, 0
      %p70 = por %p68, %p69
      %p71 = scmp.ne.s32.totalorder %s60, %s63
      %p72 = scmp.eq.s32.totalorder %s17, 1
      %p73 = por %p71, %p72
      %p74 = scmp.ne.s32.totalorder %s63, %s64
      %p75 = scmp.eq.s32.totalorder %s17, 0
      %p76 = por %p74, %p75
      %p77 = scmp.ne.s32.totalorder %s63, %s64
      %p78 = scmp.eq.s32.totalorder %s18, 1
      %p79 = por %p77, %p78
      %p81 = scmp.ne.s32.totalorder %s64, %s80
      %p82 = scmp.eq.s32.totalorder %s18, 0
      %p83 = por %p81, %p82
      %s84 = ssub.s32 %s20, %s27
      %p85 = scmp.eq.s32.totalorder %s84, 0
      %s87 = sadd.s32 %s86, 1
      %s88 = scalar_select %p85, %s86, %s87
      %p91 = pneg %p85
      %p92 = scmp.eq.s32.totalorder %s12, 1
      %p93 = por %p91, %p92
      %p94 = scmp.ne.s32.totalorder %s86, %s89
      %p95 = scmp.eq.s32.totalorder %s12, 0
      %p96 = por %p94, %p95
      %p97 = scmp.ne.s32.totalorder %s86, %s89
      %p98 = scmp.eq.s32.totalorder %s17, 1
      %p99 = por %p97, %p98
      %p100 = scmp.ne.s32.totalorder %s89, %s90
      %p101 = scmp.eq.s32.totalorder %s17, 0
      %p102 = por %p100, %p101
      %p103 = scmp.ne.s32.totalorder %s89, %s90
      %p104 = scmp.eq.s32.totalorder %s18, 1
      %p105 = por %p103, %p104
      %p107 = scmp.ne.s32.totalorder %s90, %s106
      %p108 = scmp.eq.s32.totalorder %s18, 0
      %p109 = por %p107, %p108
      %s110 = ssub.s32 %s19, %s31
      %s111 = ssub.s32 %s20, %s27
      %s112 = sor.u32 %s110, %s111
      %p113 = scmp.eq.s32.totalorder %s112, 0
      %s115 = sadd.s32 %s114, 1
      %s116 = scalar_select %p113, %s114, %s115
      %p119 = pneg %p113
      %p120 = scmp.eq.s32.totalorder %s12, 1
      %p121 = por %p119, %p120
      %p122 = scmp.ne.s32.totalorder %s114, %s117
      %p123 = scmp.eq.s32.totalorder %s12, 0
      %p124 = por %p122, %p123
      %p125 = scmp.ne.s32.totalorder %s114, %s117
      %p126 = scmp.eq.s32.totalorder %s17, 1
      %p127 = por %p125, %p126
      %p128 = scmp.ne.s32.totalorder %s117, %s118
      %p129 = scmp.eq.s32.totalorder %s17, 0
      %p130 = por %p128, %p129
      %p131 = scmp.ne.s32.totalorder %s117, %s118
      %p132 = scmp.eq.s32.totalorder %s18, 1
      %p133 = por %p131, %p132
      %p135 = scmp.ne.s32.totalorder %s118, %s134
      %p136 = scmp.eq.s32.totalorder %s18, 0
      %p137 = por %p135, %p136
      %p138 = scmp.le.s32.totalorder 1, %s12
      %p139 = scmp.lt.s32.totalorder %s12, 3
      %p140 = pnand %p138, %p139
      %p141 = pneg %p140
      // Predicated region
      $region9: #{_fused_matmul.1} parent=5 // pred_check
        _
      $region10: #{_fused_matmul.1} parent=5 // pred_check_branch
        %143 = sbr.rel (%p140) target = $region12
      $region11: #{_fused_matmul.1} parent=5 // pred_region
        %s144 = ssub.s32 %s12, 1
        // Predicated region
        $region13: #{_fused_matmul.1} parent=11 // pred_check
          %p145 = pneg %p76
        $region14: #{_fused_matmul.1} parent=11 // pred_check_branch
          %147 = sbr.rel (%p145) target = $region16
        $region15: #{_fused_matmul.1} parent=11 // pred_region
          %p148 = scmp.lt.s32.totalorder %s22, 0
          %s149 = scalar_select %p148, %s22, 0
          %s150 = smul.addr %s149, 4
          %s151 = scalar_lea.vmem %s1, %s150
        $region16: #{_fused_matmul.1} parent=11 // pred_fallthru
          _
        // Predicated region
        $region17: #{_fused_matmul.1} parent=11 // pred_check
          %p152 = pneg %p102
        $region18: #{_fused_matmul.1} parent=11 // pred_check_branch
          %154 = sbr.rel (%p152) target = $region20
        $region19: #{_fused_matmul.1} parent=11 // pred_region
          %p155 = scmp.lt.s32.totalorder %s22, 0
          %s156 = scalar_select %p155, %s22, 0
          %s157 = scalar_lea.vmem %s2, %s156
        $region20: #{_fused_matmul.1} parent=11 // pred_fallthru
          _
      $region12: #{_fused_matmul.1} parent=5 // pred_fallthru
        _
      %p158 = scmp.lt.s32.totalorder %s12, 2
      // Predicated region
      $region21: #{_fused_matmul.1} parent=5 // pred_check
        %p159 = pneg %p158
      $region22: #{_fused_matmul.1} parent=5 // pred_check_branch
        %161 = sbr.rel (%p159) target = $region24
      $region23: #{_fused_matmul.1} parent=5 // pred_region
        // Predicated region
        $region25: #{_fused_matmul.1} parent=23 // pred_check
          %p162 = pneg %p44
        $region26: #{_fused_matmul.1} parent=23 // pred_check_branch
          %164 = sbr.rel (%p162) target = $region28
        $region27: #{_fused_matmul.1} parent=23 // pred_region
          %s165 = smul.u32 98, %s19
          %p166 = scmp.lt.s32.totalorder %s165, 195
          %s167 = scalar_select %p166, %s165, 195
          %s168 = smul.addr %s167, 2
          %s169 = smul.addr %s168, 4
          %s170 = scalar_lea.vmem %s0, %s169
          %s171 = smul.u32 98, %s19
        $region28: #{_fused_matmul.1} parent=23 // pred_fallthru
          _
      $region24: #{_fused_matmul.1} parent=5 // pred_fallthru
        _
      %p172 = scmp.le.s32.totalorder 1, %s12
      %p173 = scmp.lt.s32.totalorder %s12, 3
      %p174 = pnand %p172, %p173
      %p175 = pneg %p174
      // Predicated region
      $region29: #{_fused_matmul.1} parent=5 // pred_check
        _
      $region30: #{_fused_matmul.1} parent=5 // pred_check_branch
        %177 = sbr.rel (%p174) target = $region32
      $region31: #{_fused_matmul.1} parent=5 // pred_region
        %s178 = ssub.s32 %s12, 1
        %s179 = smul.u32 98, %s21
        %p180 = scmp.lt.s32.totalorder %s179, 195
        %s181 = scalar_select %p180, %s179, 195
        %s182 = smul.addr %s181, 2
        %s183 = smul.addr %s182, 4
        %s184 = scalar_lea.vmem %s0, %s183
        %p185 = pneg %p50
        %p186 = pneg %p47
        %p187 = scmp.lt.s32.totalorder %s22, 0
        %s188 = scalar_select %p187, %s22, 0
        %s189 = smul.addr %s188, 4
        %s190 = scalar_lea.vmem %s1, %s189
        %p191 = pneg %p76
        %p192 = pneg %p73
        %p193 = scmp.lt.s32.totalorder %s22, 0
        %s194 = scalar_select %p193, %s22, 0
        %s195 = scalar_lea.vmem %s2, %s194
        %p196 = pneg %p102
        %p197 = pneg %p99
        %p198 = pneg %p130
        %p199 = pneg %p127
        %s200 = sand.u32 %s117, 1
        %s201 = scalar_lea.sflag [#allocation3], %s200
        %s202 = sand.u32 %s117, 1
        %s203 = smul.addr %s202, 392
        %s204 = scalar_lea.vmem [#allocation2], %s203
        %s205 = smul.u32 98, %s21
        %p206 = scmp.lt.s32.totalorder %s205, 195
        %s207 = scalar_select %p206, %s205, 195
        %s208 = smul.addr %s207, 2
        %s209 = smul.addr %s208, 4
        %s210 = scalar_lea.vmem %s0, %s209
        %s211 = smul.u32 98, %s21
        %p212 = scmp.lt.s32.totalorder %s22, 0
        %s213 = scalar_select %p212, %s22, 0
        %s214 = smul.addr %s213, 4
        %s215 = scalar_lea.vmem %s1, %s214
        %p216 = scmp.lt.s32.totalorder %s22, 0
        %s217 = scalar_select %p216, %s22, 0
        %s218 = scalar_lea.vmem %s2, %s217
        %s219 = smul.u32 98, %s21
        %v221 = vld [vmem:[%s210] sm:$0xff]
        %v222 = vld [vmem:[%s210 + $0x8] sm:$0xff]
        %v223 = vld [vmem:[%s210 + $0x10] sm:$0xff]
        %v224 = vld [vmem:[%s210 + $0x18] sm:$0xff]
        %v225 = vld [vmem:[%s210 + $0x20] sm:$0xff]
        %v226 = vld [vmem:[%s210 + $0x28] sm:$0xff]
        %v227 = vld [vmem:[%s210 + $0x30] sm:$0xff]
        %v228 = vld [vmem:[%s210 + $0x38] sm:$0xff]
        %v229 = vld [vmem:[%s210 + $0x40] sm:$0xff]
        %v230 = vld [vmem:[%s210 + $0x48] sm:$0xff]
        %v231 = vld [vmem:[%s210 + $0x50] sm:$0xff]
        %v232 = vld [vmem:[%s210 + $0x58] sm:$0xff]
        %v233 = vld [vmem:[%s210 + $0x60] sm:$0xff]
        %v234 = vld [vmem:[%s210 + $0x68] sm:$0xff]
        %v235 = vld [vmem:[%s210 + $0x70] sm:$0xff]
        %v236 = vld [vmem:[%s210 + $0x78] sm:$0xff]
        %v237 = vld [vmem:[%s210 + $0x80] sm:$0xff]
        %v238 = vld [vmem:[%s210 + $0x88] sm:$0xff]
        %v239 = vld [vmem:[%s210 + $0x90] sm:$0xff]
        %v240 = vld [vmem:[%s210 + $0x98] sm:$0xff]
        %v241 = vld [vmem:[%s210 + $0xa0] sm:$0xff]
        %v242 = vld [vmem:[%s210 + $0xa8] sm:$0xff]
        %v243 = vld [vmem:[%s210 + $0xb0] sm:$0xff]
        %v244 = vld [vmem:[%s210 + $0xb8] sm:$0xff]
        %v245 = vld [vmem:[%s210 + $0xc0] sm:$0xff]
        %v246 = vld [vmem:[%s210 + $0xc8] sm:$0xff]
        %v247 = vld [vmem:[%s210 + $0xd0] sm:$0xff]
        %v248 = vld [vmem:[%s210 + $0xd8] sm:$0xff]
        %v249 = vld [vmem:[%s210 + $0xe0] sm:$0xff]
        %v250 = vld [vmem:[%s210 + $0xe8] sm:$0xff]
        %v251 = vld [vmem:[%s210 + $0xf0] sm:$0xff]
        %v252 = vld [vmem:[%s210 + $0xf8] sm:$0xff]
        %v253 = vld [vmem:[%s210 + $0x100] sm:$0xff]
        %v254 = vld [vmem:[%s210 + $0x108] sm:$0xff]
        %v255 = vld [vmem:[%s210 + $0x110] sm:$0xff]
        %v256 = vld [vmem:[%s210 + $0x118] sm:$0xff]
        %v257 = vld [vmem:[%s210 + $0x120] sm:$0xff]
        %v258 = vld [vmem:[%s210 + $0x128] sm:$0xff]
        %v259 = vld [vmem:[%s210 + $0x130] sm:$0xff]
        %v260 = vld [vmem:[%s210 + $0x138] sm:$0xff]
        %v261 = vld [vmem:[%s210 + $0x140] sm:$0xff]
        %v262 = vld [vmem:[%s210 + $0x148] sm:$0xff]
        %v263 = vld [vmem:[%s210 + $0x150] sm:$0xff]
        %v264 = vld [vmem:[%s210 + $0x158] sm:$0xff]
        %v265 = vld [vmem:[%s210 + $0x160] sm:$0xff]
        %v266 = vld [vmem:[%s210 + $0x168] sm:$0xff]
        %v267 = vld [vmem:[%s210 + $0x170] sm:$0xff]
        %v268 = vld [vmem:[%s210 + $0x178] sm:$0xff]
        %v269 = vld [vmem:[%s210 + $0x180] sm:$0xff]
        %v270 = vld [vmem:[%s210 + $0x188] sm:$0xff]
        %v271 = vld [vmem:[%s210 + $0x190] sm:$0xff]
        %v272 = vld [vmem:[%s210 + $0x198] sm:$0xff]
        %v273 = vld [vmem:[%s210 + $0x1a0] sm:$0xff]
        %v274 = vld [vmem:[%s210 + $0x1a8] sm:$0xff]
        %v275 = vld [vmem:[%s210 + $0x1b0] sm:$0xff]
        %v276 = vld [vmem:[%s210 + $0x1b8] sm:$0xff]
        %v277 = vld [vmem:[%s210 + $0x1c0] sm:$0xff]
        %v278 = vld [vmem:[%s210 + $0x1c8] sm:$0xff]
        %v279 = vld [vmem:[%s210 + $0x1d0] sm:$0xff]
        %v280 = vld [vmem:[%s210 + $0x1d8] sm:$0xff]
        %v281 = vld [vmem:[%s210 + $0x1e0] sm:$0xff]
        %v282 = vld [vmem:[%s210 + $0x1e8] sm:$0xff]
        %v283 = vld [vmem:[%s210 + $0x1f0] sm:$0xff]
        %v284 = vld [vmem:[%s210 + $0x1f8] sm:$0xff]
        %v285 = vld [vmem:[%s210 + $0x200] sm:$0xff]
        %v286 = vld [vmem:[%s210 + $0x208] sm:$0xff]
        %v287 = vld [vmem:[%s210 + $0x210] sm:$0xff]
        %v288 = vld [vmem:[%s210 + $0x218] sm:$0xff]
        %v289 = vld [vmem:[%s210 + $0x220] sm:$0xff]
        %v290 = vld [vmem:[%s210 + $0x228] sm:$0xff]
        %v291 = vld [vmem:[%s210 + $0x230] sm:$0xff]
        %v292 = vld [vmem:[%s210 + $0x238] sm:$0xff]
        %v293 = vld [vmem:[%s210 + $0x240] sm:$0xff]
        %v294 = vld [vmem:[%s210 + $0x248] sm:$0xff]
        %v295 = vld [vmem:[%s210 + $0x250] sm:$0xff]
        %v296 = vld [vmem:[%s210 + $0x258] sm:$0xff]
        %v297 = vld [vmem:[%s210 + $0x260] sm:$0xff]
        %v298 = vld [vmem:[%s210 + $0x268] sm:$0xff]
        %v299 = vld [vmem:[%s210 + $0x270] sm:$0xff]
        %v300 = vld [vmem:[%s210 + $0x278] sm:$0xff]
        %v301 = vld [vmem:[%s210 + $0x280] sm:$0xff]
        %v302 = vld [vmem:[%s210 + $0x288] sm:$0xff]
        %v303 = vld [vmem:[%s210 + $0x290] sm:$0xff]
        %v304 = vld [vmem:[%s210 + $0x298] sm:$0xff]
        %v305 = vld [vmem:[%s210 + $0x2a0] sm:$0xff]
        %v306 = vld [vmem:[%s210 + $0x2a8] sm:$0xff]
        %v307 = vld [vmem:[%s210 + $0x2b0] sm:$0xff]
        %v308 = vld [vmem:[%s210 + $0x2b8] sm:$0xff]
        %v309 = vld [vmem:[%s210 + $0x2c0] sm:$0xff]
        %v310 = vld [vmem:[%s210 + $0x2c8] sm:$0xff]
        %v311 = vld [vmem:[%s210 + $0x2d0] sm:$0xff]
        %v312 = vld [vmem:[%s210 + $0x2d8] sm:$0xff]
        %v313 = vld [vmem:[%s210 + $0x2e0] sm:$0xff]
        %v314 = vld [vmem:[%s210 + $0x2e8] sm:$0xff]
        %v315 = vld [vmem:[%s210 + $0x2f0] sm:$0xff]
        %v316 = vld [vmem:[%s210 + $0x2f8] sm:$0xff]
        %v317 = vld [vmem:[%s210 + $0x300] sm:$0xff]
        %v318 = vld [vmem:[%s210 + $0x308] sm:$0xff]
        %v319 = vld [vmem:[%s215] sm:$0xf]
        %v320 = vld [vmem:[%s215 + $0x4] sm:$0xf]
        %v321 = vld [vmem:[%s215 + $0x8] sm:$0xf]
        %v322 = vld [vmem:[%s215 + $0xc] sm:$0xf]
        %v323 = vld [vmem:[%s215 + $0x10] sm:$0xf]
        %v324 = vld [vmem:[%s215 + $0x14] sm:$0xf]
        %v325 = vld [vmem:[%s215 + $0x18] sm:$0xf]
        %v326 = vld [vmem:[%s215 + $0x1c] sm:$0xf]
        %v327 = vld [vmem:[%s215 + $0x20] sm:$0xf]
        %v328 = vld [vmem:[%s215 + $0x24] sm:$0xf]
        %v329 = vld [vmem:[%s215 + $0x28] sm:$0xf]
        %v330 = vld [vmem:[%s215 + $0x2c] sm:$0xf]
        %v331 = vld [vmem:[%s215 + $0x30] sm:$0xf]
        %v332 = vld [vmem:[%s215 + $0x34] sm:$0xf]
        %v333 = vld [vmem:[%s215 + $0x38] sm:$0xf]
        %v334 = vld [vmem:[%s215 + $0x3c] sm:$0xf]
        %v335 = vld [vmem:[%s215 + $0x40] sm:$0xf]
        %v336 = vld [vmem:[%s215 + $0x44] sm:$0xf]
        %v337 = vld [vmem:[%s215 + $0x48] sm:$0xf]
        %v338 = vld [vmem:[%s215 + $0x4c] sm:$0xf]
        %v339 = vld [vmem:[%s215 + $0x50] sm:$0xf]
        %v340 = vld [vmem:[%s215 + $0x54] sm:$0xf]
        %v341 = vld [vmem:[%s215 + $0x58] sm:$0xf]
        %v342 = vld [vmem:[%s215 + $0x5c] sm:$0xf]
        %v343 = vld [vmem:[%s215 + $0x60] sm:$0xf]
        %v344 = vld [vmem:[%s215 + $0x64] sm:$0xf]
        %v345 = vld [vmem:[%s215 + $0x68] sm:$0xf]
        %v346 = vld [vmem:[%s215 + $0x6c] sm:$0xf]
        %v347 = vld [vmem:[%s215 + $0x70] sm:$0xf]
        %v348 = vld [vmem:[%s215 + $0x74] sm:$0xf]
        %v349 = vld [vmem:[%s215 + $0x78] sm:$0xf]
        %v350 = vld [vmem:[%s215 + $0x7c] sm:$0xf]
        %v351 = vld [vmem:[%s218] sm:$0x1]
        %v353 = vlaneseq
        %v354 = vshrl.u32 %v353, 7
        %v355 = vsub.s32 0, %v354
        %v356 = vrot.slane %v351, %v355
        %v456 = vunpack.c.l.b16 %v221
        %v457 = vunpack.c.h.b16 %v221
        %v458 = vunpack.c.l.b16 %v222
        %v459 = vunpack.c.h.b16 %v222
        %v460 = vunpack.c.l.b16 %v223
        %v461 = vunpack.c.h.b16 %v223
        %v462 = vunpack.c.l.b16 %v224
        %v463 = vunpack.c.h.b16 %v224
        %v464 = vunpack.c.l.b16 %v225
        %v465 = vunpack.c.h.b16 %v225
        %v466 = vunpack.c.l.b16 %v226
        %v467 = vunpack.c.h.b16 %v226
        %v468 = vunpack.c.l.b16 %v227
        %v469 = vunpack.c.h.b16 %v227
        %v470 = vunpack.c.l.b16 %v228
        %v471 = vunpack.c.h.b16 %v228
        %v472 = vunpack.c.l.b16 %v229
        %v473 = vunpack.c.h.b16 %v229
        %v474 = vunpack.c.l.b16 %v230
        %v475 = vunpack.c.h.b16 %v230
        %v476 = vunpack.c.l.b16 %v231
        %v477 = vunpack.c.h.b16 %v231
        %v478 = vunpack.c.l.b16 %v232
        %v479 = vunpack.c.h.b16 %v232
        %v480 = vunpack.c.l.b16 %v233
        %v481 = vunpack.c.h.b16 %v233
        %v482 = vunpack.c.l.b16 %v234
        %v483 = vunpack.c.h.b16 %v234
        %v484 = vunpack.c.l.b16 %v235
        %v485 = vunpack.c.h.b16 %v235
        %v486 = vunpack.c.l.b16 %v236
        %v487 = vunpack.c.h.b16 %v236
        %v488 = vunpack.c.l.b16 %v237
        %v489 = vunpack.c.h.b16 %v237
        %v490 = vunpack.c.l.b16 %v238
        %v491 = vunpack.c.h.b16 %v238
        %v492 = vunpack.c.l.b16 %v239
        %v493 = vunpack.c.h.b16 %v239
        %v494 = vunpack.c.l.b16 %v240
        %v495 = vunpack.c.h.b16 %v240
        %v496 = vunpack.c.l.b16 %v241
        %v497 = vunpack.c.h.b16 %v241
        %v498 = vunpack.c.l.b16 %v242
        %v499 = vunpack.c.h.b16 %v242
        %v500 = vunpack.c.l.b16 %v243
        %v501 = vunpack.c.h.b16 %v243
        %v502 = vunpack.c.l.b16 %v244
        %v503 = vunpack.c.h.b16 %v244
        %v504 = vunpack.c.l.b16 %v245
        %v505 = vunpack.c.h.b16 %v245
        %v506 = vunpack.c.l.b16 %v246
        %v507 = vunpack.c.h.b16 %v246
        %v508 = vunpack.c.l.b16 %v247
        %v509 = vunpack.c.h.b16 %v247
        %v510 = vunpack.c.l.b16 %v248
        %v511 = vunpack.c.h.b16 %v248
        %v512 = vunpack.c.l.b16 %v249
        %v513 = vunpack.c.h.b16 %v249
        %v514 = vunpack.c.l.b16 %v250
        %v515 = vunpack.c.h.b16 %v250
        %v516 = vunpack.c.l.b16 %v251
        %v517 = vunpack.c.h.b16 %v251
        %v518 = vunpack.c.l.b16 %v252
        %v519 = vunpack.c.h.b16 %v252
        %v520 = vunpack.c.l.b16 %v253
        %v521 = vunpack.c.h.b16 %v253
        %v522 = vunpack.c.l.b16 %v254
        %v523 = vunpack.c.h.b16 %v254
        %v524 = vunpack.c.l.b16 %v255
        %v525 = vunpack.c.h.b16 %v255
        %v526 = vunpack.c.l.b16 %v256
        %v527 = vunpack.c.h.b16 %v256
        %v528 = vunpack.c.l.b16 %v257
        %v529 = vunpack.c.h.b16 %v257
        %v530 = vunpack.c.l.b16 %v258
        %v531 = vunpack.c.h.b16 %v258
        %v532 = vunpack.c.l.b16 %v259
        %v533 = vunpack.c.h.b16 %v259
        %v534 = vunpack.c.l.b16 %v260
        %v535 = vunpack.c.h.b16 %v260
        %v536 = vunpack.c.l.b16 %v261
        %v537 = vunpack.c.h.b16 %v261
        %v538 = vunpack.c.l.b16 %v262
        %v539 = vunpack.c.h.b16 %v262
        %v540 = vunpack.c.l.b16 %v263
        %v541 = vunpack.c.h.b16 %v263
        %v542 = vunpack.c.l.b16 %v264
        %v543 = vunpack.c.h.b16 %v264
        %v544 = vunpack.c.l.b16 %v265
        %v545 = vunpack.c.h.b16 %v265
        %v546 = vunpack.c.l.b16 %v266
        %v547 = vunpack.c.h.b16 %v266
        %v548 = vunpack.c.l.b16 %v267
        %v549 = vunpack.c.h.b16 %v267
        %v550 = vunpack.c.l.b16 %v268
        %v551 = vunpack.c.h.b16 %v268
        %v552 = vunpack.c.l.b16 %v269
        %v553 = vunpack.c.h.b16 %v269
        %v554 = vunpack.c.l.b16 %v270
        %v555 = vunpack.c.h.b16 %v270
        %v556 = vunpack.c.l.b16 %v271
        %v557 = vunpack.c.h.b16 %v271
        %v558 = vunpack.c.l.b16 %v272
        %v559 = vunpack.c.h.b16 %v272
        %v560 = vunpack.c.l.b16 %v273
        %v561 = vunpack.c.h.b16 %v273
        %v562 = vunpack.c.l.b16 %v274
        %v563 = vunpack.c.h.b16 %v274
        %v564 = vunpack.c.l.b16 %v275
        %v565 = vunpack.c.h.b16 %v275
        %v566 = vunpack.c.l.b16 %v276
        %v567 = vunpack.c.h.b16 %v276
        %v568 = vunpack.c.l.b16 %v277
        %v569 = vunpack.c.h.b16 %v277
        %v570 = vunpack.c.l.b16 %v278
        %v571 = vunpack.c.h.b16 %v278
        %v572 = vunpack.c.l.b16 %v279
        %v573 = vunpack.c.h.b16 %v279
        %v574 = vunpack.c.l.b16 %v280
        %v575 = vunpack.c.h.b16 %v280
        %v576 = vunpack.c.l.b16 %v281
        %v577 = vunpack.c.h.b16 %v281
        %v578 = vunpack.c.l.b16 %v282
        %v579 = vunpack.c.h.b16 %v282
        %v580 = vunpack.c.l.b16 %v283
        %v581 = vunpack.c.h.b16 %v283
        %v582 = vunpack.c.l.b16 %v284
        %v583 = vunpack.c.h.b16 %v284
        %v584 = vunpack.c.l.b16 %v285
        %v585 = vunpack.c.h.b16 %v285
        %v586 = vunpack.c.l.b16 %v286
        %v587 = vunpack.c.h.b16 %v286
        %v588 = vunpack.c.l.b16 %v287
        %v589 = vunpack.c.h.b16 %v287
        %v590 = vunpack.c.l.b16 %v288
        %v591 = vunpack.c.h.b16 %v288
        %v592 = vunpack.c.l.b16 %v289
        %v593 = vunpack.c.h.b16 %v289
        %v594 = vunpack.c.l.b16 %v290
        %v595 = vunpack.c.h.b16 %v290
        %v596 = vunpack.c.l.b16 %v291
        %v597 = vunpack.c.h.b16 %v291
        %v598 = vunpack.c.l.b16 %v292
        %v599 = vunpack.c.h.b16 %v292
        %v600 = vunpack.c.l.b16 %v293
        %v601 = vunpack.c.h.b16 %v293
        %v602 = vunpack.c.l.b16 %v294
        %v603 = vunpack.c.h.b16 %v294
        %v604 = vunpack.c.l.b16 %v295
        %v605 = vunpack.c.h.b16 %v295
        %v606 = vunpack.c.l.b16 %v296
        %v607 = vunpack.c.h.b16 %v296
        %v608 = vunpack.c.l.b16 %v297
        %v609 = vunpack.c.h.b16 %v297
        %v610 = vunpack.c.l.b16 %v298
        %v611 = vunpack.c.h.b16 %v298
        %v612 = vunpack.c.l.b16 %v299
        %v613 = vunpack.c.h.b16 %v299
        %v614 = vunpack.c.l.b16 %v300
        %v615 = vunpack.c.h.b16 %v300
        %v616 = vunpack.c.l.b16 %v301
        %v617 = vunpack.c.h.b16 %v301
        %v618 = vunpack.c.l.b16 %v302
        %v619 = vunpack.c.h.b16 %v302
        %v620 = vunpack.c.l.b16 %v303
        %v621 = vunpack.c.h.b16 %v303
        %v622 = vunpack.c.l.b16 %v304
        %v623 = vunpack.c.h.b16 %v304
        %v624 = vunpack.c.l.b16 %v305
        %v625 = vunpack.c.h.b16 %v305
        %v626 = vunpack.c.l.b16 %v306
        %v627 = vunpack.c.h.b16 %v306
        %v628 = vunpack.c.l.b16 %v307
        %v629 = vunpack.c.h.b16 %v307
        %v630 = vunpack.c.l.b16 %v308
        %v631 = vunpack.c.h.b16 %v308
        %v632 = vunpack.c.l.b16 %v309
        %v633 = vunpack.c.h.b16 %v309
        %v634 = vunpack.c.l.b16 %v310
        %v635 = vunpack.c.h.b16 %v310
        %v636 = vunpack.c.l.b16 %v311
        %v637 = vunpack.c.h.b16 %v311
        %v638 = vunpack.c.l.b16 %v312
        %v639 = vunpack.c.h.b16 %v312
        %v640 = vunpack.c.l.b16 %v313
        %v641 = vunpack.c.h.b16 %v313
        %v642 = vunpack.c.l.b16 %v314
        %v643 = vunpack.c.h.b16 %v314
        %v644 = vunpack.c.l.b16 %v315
        %v645 = vunpack.c.h.b16 %v315
        %v646 = vunpack.c.l.b16 %v316
        %v647 = vunpack.c.h.b16 %v316
        %v648 = vunpack.c.l.b16 %v317
        %v649 = vunpack.c.h.b16 %v317
        %v650 = vunpack.c.l.b16 %v318
        %v651 = vunpack.c.h.b16 %v318
        %v652 = vpack.c.b16 %v458, %v456
        %v653 = vpack.c.b16 %v459, %v457
        %v654 = vpack.c.b16 %v462, %v460
        %v655 = vpack.c.b16 %v463, %v461
        %v656 = vpack.c.b16 %v466, %v464
        %v657 = vpack.c.b16 %v467, %v465
        %v658 = vpack.c.b16 %v470, %v468
        %v659 = vpack.c.b16 %v471, %v469
        %v660 = vpack.c.b16 %v474, %v472
        %v661 = vpack.c.b16 %v475, %v473
        %v662 = vpack.c.b16 %v478, %v476
        %v663 = vpack.c.b16 %v479, %v477
        %v664 = vpack.c.b16 %v482, %v480
        %v665 = vpack.c.b16 %v483, %v481
        %v666 = vpack.c.b16 %v486, %v484
        %v667 = vpack.c.b16 %v487, %v485
        %v668 = vpack.c.b16 %v490, %v488
        %v669 = vpack.c.b16 %v491, %v489
        %v670 = vpack.c.b16 %v494, %v492
        %v671 = vpack.c.b16 %v495, %v493
        %v672 = vpack.c.b16 %v498, %v496
        %v673 = vpack.c.b16 %v499, %v497
        %v674 = vpack.c.b16 %v502, %v500
        %v675 = vpack.c.b16 %v503, %v501
        %v676 = vpack.c.b16 %v506, %v504
        %v677 = vpack.c.b16 %v507, %v505
        %v678 = vpack.c.b16 %v510, %v508
        %v679 = vpack.c.b16 %v511, %v509
        %v680 = vpack.c.b16 %v514, %v512
        %v681 = vpack.c.b16 %v515, %v513
        %v682 = vpack.c.b16 %v518, %v516
        %v683 = vpack.c.b16 %v519, %v517
        %v684 = vpack.c.b16 %v522, %v520
        %v685 = vpack.c.b16 %v523, %v521
        %v686 = vpack.c.b16 %v526, %v524
        %v687 = vpack.c.b16 %v527, %v525
        %v688 = vpack.c.b16 %v530, %v528
        %v689 = vpack.c.b16 %v531, %v529
        %v690 = vpack.c.b16 %v534, %v532
        %v691 = vpack.c.b16 %v535, %v533
        %v692 = vpack.c.b16 %v538, %v536
        %v693 = vpack.c.b16 %v539, %v537
        %v694 = vpack.c.b16 %v542, %v540
        %v695 = vpack.c.b16 %v543, %v541
        %v696 = vpack.c.b16 %v546, %v544
        %v697 = vpack.c.b16 %v547, %v545
        %v698 = vpack.c.b16 %v550, %v548
        %v699 = vpack.c.b16 %v551, %v549
        %v700 = vpack.c.b16 %v554, %v552
        %v701 = vpack.c.b16 %v555, %v553
        %v702 = vpack.c.b16 %v558, %v556
        %v703 = vpack.c.b16 %v559, %v557
        %v704 = vpack.c.b16 %v562, %v560
        %v705 = vpack.c.b16 %v563, %v561
        %v706 = vpack.c.b16 %v566, %v564
        %v707 = vpack.c.b16 %v567, %v565
        %v708 = vpack.c.b16 %v570, %v568
        %v709 = vpack.c.b16 %v571, %v569
        %v710 = vpack.c.b16 %v574, %v572
        %v711 = vpack.c.b16 %v575, %v573
        %v712 = vpack.c.b16 %v578, %v576
        %v713 = vpack.c.b16 %v579, %v577
        %v714 = vpack.c.b16 %v582, %v580
        %v715 = vpack.c.b16 %v583, %v581
        %v716 = vpack.c.b16 %v586, %v584
        %v717 = vpack.c.b16 %v587, %v585
        %v718 = vpack.c.b16 %v590, %v588
        %v719 = vpack.c.b16 %v591, %v589
        %v720 = vpack.c.b16 %v594, %v592
        %v721 = vpack.c.b16 %v595, %v593
        %v722 = vpack.c.b16 %v598, %v596
        %v723 = vpack.c.b16 %v599, %v597
        %v724 = vpack.c.b16 %v602, %v600
        %v725 = vpack.c.b16 %v603, %v601
        %v726 = vpack.c.b16 %v606, %v604
        %v727 = vpack.c.b16 %v607, %v605
        %v728 = vpack.c.b16 %v610, %v608
        %v729 = vpack.c.b16 %v611, %v609
        %v730 = vpack.c.b16 %v614, %v612
        %v731 = vpack.c.b16 %v615, %v613
        %v732 = vpack.c.b16 %v618, %v616
        %v733 = vpack.c.b16 %v619, %v617
        %v734 = vpack.c.b16 %v622, %v620
        %v735 = vpack.c.b16 %v623, %v621
        %v736 = vpack.c.b16 %v626, %v624
        %v737 = vpack.c.b16 %v627, %v625
        %v738 = vpack.c.b16 %v630, %v628
        %v739 = vpack.c.b16 %v631, %v629
        %v740 = vpack.c.b16 %v634, %v632
        %v741 = vpack.c.b16 %v635, %v633
        %v742 = vpack.c.b16 %v638, %v636
        %v743 = vpack.c.b16 %v639, %v637
        %v744 = vpack.c.b16 %v642, %v640
        %v745 = vpack.c.b16 %v643, %v641
        %v746 = vpack.c.b16 %v646, %v644
        %v747 = vpack.c.b16 %v647, %v645
        %v748 = vpack.c.b16 %v650, %v648
        %v749 = vpack.c.b16 %v651, %v649
        %v880 = vunpack.c.l.b16 %v319
        %v881 = vunpack.c.l.b16 %v320
        %v882 = vunpack.c.l.b16 %v321
        %v883 = vunpack.c.l.b16 %v322
        %v884 = vunpack.c.l.b16 %v323
        %v885 = vunpack.c.l.b16 %v324
        %v886 = vunpack.c.l.b16 %v325
        %v887 = vunpack.c.l.b16 %v326
        %v888 = vunpack.c.l.b16 %v327
        %v889 = vunpack.c.l.b16 %v328
        %v890 = vunpack.c.l.b16 %v329
        %v891 = vunpack.c.l.b16 %v330
        %v892 = vunpack.c.l.b16 %v331
        %v893 = vunpack.c.l.b16 %v332
        %v894 = vunpack.c.l.b16 %v333
        %v895 = vunpack.c.l.b16 %v334
        %v896 = vunpack.c.l.b16 %v335
        %v897 = vunpack.c.l.b16 %v336
        %v898 = vunpack.c.l.b16 %v337
        %v899 = vunpack.c.l.b16 %v338
        %v900 = vunpack.c.l.b16 %v339
        %v901 = vunpack.c.l.b16 %v340
        %v902 = vunpack.c.l.b16 %v341
        %v903 = vunpack.c.l.b16 %v342
        %v904 = vunpack.c.l.b16 %v343
        %v905 = vunpack.c.l.b16 %v344
        %v906 = vunpack.c.l.b16 %v345
        %v907 = vunpack.c.l.b16 %v346
        %v908 = vunpack.c.l.b16 %v347
        %v909 = vunpack.c.l.b16 %v348
        %v910 = vunpack.c.l.b16 %v349
        %v911 = vunpack.c.l.b16 %v350
        %v912 = vpack.c.b16 %v881, %v880
        %v913 = vpack.c.b16 %v883, %v882
        %v914 = vpack.c.b16 %v885, %v884
        %v915 = vpack.c.b16 %v887, %v886
        %v916 = vpack.c.b16 %v889, %v888
        %v917 = vpack.c.b16 %v891, %v890
        %v918 = vpack.c.b16 %v893, %v892
        %v919 = vpack.c.b16 %v895, %v894
        %v920 = vpack.c.b16 %v897, %v896
        %v921 = vpack.c.b16 %v899, %v898
        %v922 = vpack.c.b16 %v901, %v900
        %v923 = vpack.c.b16 %v903, %v902
        %v924 = vpack.c.b16 %v905, %v904
        %v925 = vpack.c.b16 %v907, %v906
        %v926 = vpack.c.b16 %v909, %v908
        %v927 = vpack.c.b16 %v911, %v910
        %944 = vmatprep.subr.bf16.mxu0 0
        %945 = vmatpush1.bf16.msra.mxu0 %v912
        %946 = vmatprep.subr.bf16.mxu0 0
        %947 = vmatpush1.bf16.msra.mxu0 %v913
        %948 = vmatprep.subr.bf16.mxu0 0
        %949 = vmatpush1.bf16.msra.mxu0 %v914
        %950 = vmatprep.subr.bf16.mxu0 0
        %951 = vmatpush1.bf16.msra.mxu0 %v915
        %952 = vmatprep.subr.bf16.mxu0 0
        %953 = vmatpush1.bf16.msra.mxu0 %v916
        %954 = vmatprep.subr.bf16.mxu0 0
        %955 = vmatpush1.bf16.msra.mxu0 %v917
        %956 = vmatprep.subr.bf16.mxu0 0
        %957 = vmatpush1.bf16.msra.mxu0 %v918
        %958 = vmatprep.subr.bf16.mxu0 0
        %959 = vmatpush1.bf16.msra.mxu0 %v919
        %960 = vmatprep.subr.bf16.mxu0 0
        %961 = vmatpush1.bf16.msra.mxu0 %v920
        %962 = vmatprep.subr.bf16.mxu0 0
        %963 = vmatpush1.bf16.msra.mxu0 %v921
        %964 = vmatprep.subr.bf16.mxu0 0
        %965 = vmatpush1.bf16.msra.mxu0 %v922
        %966 = vmatprep.subr.bf16.mxu0 0
        %967 = vmatpush1.bf16.msra.mxu0 %v923
        %968 = vmatprep.subr.bf16.mxu0 0
        %969 = vmatpush1.bf16.msra.mxu0 %v924
        %970 = vmatprep.subr.bf16.mxu0 0
        %971 = vmatpush1.bf16.msra.mxu0 %v925
        %972 = vmatprep.subr.bf16.mxu0 0
        %973 = vmatpush1.bf16.msra.mxu0 %v926
        %974 = vmatprep.subr.bf16.mxu0 0
        %975 = vmatpush1.bf16.msra.mxu0 %v927
        %976 = vmatprep.mubr.bf16.mxu0 %v653
        %977 = vmatmul.mubr.bf16.gmra.mrb[0].mxu0 %v652
        %v978 = vpop.f32.mrb[0].mxu0
        %v979 = vadd.f32 %v356, %v978
        %v980 = vpop.f32.mrb[0].mxu0
        %v981 = vpop.f32.mrb[0].mxu0
        %v982 = vadd.f32 %v356, %v981
        %v983 = vpop.f32.mrb[0].mxu0
        %984 = vmatprep.mubr.bf16.mxu0 %v655
        %985 = vmatmul.mubr.bf16.gmra.mrb[0].mxu0 %v654
        %v986 = vpop.f32.mrb[0].mxu0
        %v987 = vadd.f32 %v356, %v986
        %v988 = vpop.f32.mrb[0].mxu0
        %v989 = vpop.f32.mrb[0].mxu0
        %v990 = vadd.f32 %v356, %v989
        %v991 = vpop.f32.mrb[0].mxu0
        %992 = vmatprep.mubr.bf16.mxu0 %v657
        %993 = vmatmul.mubr.bf16.gmra.mrb[0].mxu0 %v656
        %v994 = vpop.f32.mrb[0].mxu0
        %v995 = vadd.f32 %v356, %v994
        %v996 = vpop.f32.mrb[0].mxu0
        %v997 = vpop.f32.mrb[0].mxu0
        %v998 = vadd.f32 %v356, %v997
        %v999 = vpop.f32.mrb[0].mxu0
        %1000 = vmatprep.mubr.bf16.mxu0 %v659
        %1001 = vmatmul.mubr.bf16.gmra.mrb[0].mxu0 %v658
        %v1002 = vpop.f32.mrb[0].mxu0
        %v1003 = vadd.f32 %v356, %v1002
        %v1004 = vpop.f32.mrb[0].mxu0
        %v1005 = vpop.f32.mrb[0].mxu0
        %v1006 = vadd.f32 %v356, %v1005
        %v1007 = vpop.f32.mrb[0].mxu0
        %1008 = vmatprep.mubr.bf16.mxu0 %v661
        %1009 = vmatmul.mubr.bf16.gmra.mrb[0].mxu0 %v660
        %v1010 = vpop.f32.mrb[0].mxu0
        %v1011 = vadd.f32 %v356, %v1010
        %v1012 = vpop.f32.mrb[0].mxu0
        %v1013 = vpop.f32.mrb[0].mxu0
        %v1014 = vadd.f32 %v356, %v1013
        %v1015 = vpop.f32.mrb[0].mxu0
        %1016 = vmatprep.mubr.bf16.mxu0 %v663
        %1017 = vmatmul.mubr.bf16.gmra.mrb[0].mxu0 %v662
        %v1018 = vpop.f32.mrb[0].mxu0
        %v1019 = vadd.f32 %v356, %v1018
        %v1020 = vpop.f32.mrb[0].mxu0
        %v1021 = vpop.f32.mrb[0].mxu0
        %v1022 = vadd.f32 %v356, %v1021
        %v1023 = vpop.f32.mrb[0].mxu0
        %1024 = vmatprep.mubr.bf16.mxu0 %v665
        %1025 = vmatmul.mubr.bf16.gmra.mrb[0].mxu0 %v664
        %v1026 = vpop.f32.mrb[0].mxu0
        %v1027 = vadd.f32 %v356, %v1026
        %v1028 = vpop.f32.mrb[0].mxu0
        %v1029 = vpop.f32.mrb[0].mxu0
        %v1030 = vadd.f32 %v356, %v1029
        %v1031 = vpop.f32.mrb[0].mxu0
        %1032 = vmatprep.mubr.bf16.mxu0 %v667
        %1033 = vmatmul.mubr.bf16.gmra.mrb[0].mxu0 %v666
        %v1034 = vpop.f32.mrb[0].mxu0
        %v1035 = vadd.f32 %v356, %v1034
        %v1036 = vpop.f32.mrb[0].mxu0
        %v1037 = vpop.f32.mrb[0].mxu0
        %v1038 = vadd.f32 %v356, %v1037
        %v1039 = vpop.f32.mrb[0].mxu0
        %1040 = vmatprep.mubr.bf16.mxu0 %v669
        %1041 = vmatmul.mubr.bf16.gmra.mrb[0].mxu0 %v668
        %v1042 = vpop.f32.mrb[0].mxu0
        %v1043 = vadd.f32 %v356, %v1042
        %v1044 = vpop.f32.mrb[0].mxu0
        %v1045 = vpop.f32.mrb[0].mxu0
        %v1046 = vadd.f32 %v356, %v1045
        %v1047 = vpop.f32.mrb[0].mxu0
        %1048 = vmatprep.mubr.bf16.mxu0 %v671
        %1049 = vmatmul.mubr.bf16.gmra.mrb[0].mxu0 %v670
        %v1050 = vpop.f32.mrb[0].mxu0
        %v1051 = vadd.f32 %v356, %v1050
        %v1052 = vpop.f32.mrb[0].mxu0
        %v1053 = vpop.f32.mrb[0].mxu0
        %v1054 = vadd.f32 %v356, %v1053
        %v1055 = vpop.f32.mrb[0].mxu0
        %1056 = vmatprep.mubr.bf16.mxu0 %v673
        %1057 = vmatmul.mubr.bf16.gmra.mrb[0].mxu0 %v672
        %v1058 = vpop.f32.mrb[0].mxu0
        %v1059 = vadd.f32 %v356, %v1058
        %v1060 = vpop.f32.mrb[0].mxu0
        %v1061 = vpop.f32.mrb[0].mxu0
        %v1062 = vadd.f32 %v356, %v1061
        %v1063 = vpop.f32.mrb[0].mxu0
        %1064 = vmatprep.mubr.bf16.mxu0 %v675
        %1065 = vmatmul.mubr.bf16.gmra.mrb[0].mxu0 %v674
        %v1066 = vpop.f32.mrb[0].mxu0
        %v1067 = vadd.f32 %v356, %v1066
        %v1068 = vpop.f32.mrb[0].mxu0
        %v1069 = vpop.f32.mrb[0].mxu0
        %v1070 = vadd.f32 %v356, %v1069
        %v1071 = vpop.f32.mrb[0].mxu0
        %1072 = vmatprep.mubr.bf16.mxu0 %v677
        %1073 = vmatmul.mubr.bf16.gmra.mrb[0].mxu0 %v676
        %v1074 = vpop.f32.mrb[0].mxu0
        %v1075 = vadd.f32 %v356, %v1074
        %v1076 = vpop.f32.mrb[0].mxu0
        %v1077 = vpop.f32.mrb[0].mxu0
        %v1078 = vadd.f32 %v356, %v1077
        %v1079 = vpop.f32.mrb[0].mxu0
        %1080 = vmatprep.mubr.bf16.mxu0 %v679
        %1081 = vmatmul.mubr.bf16.gmra.mrb[0].mxu0 %v678
        %v1082 = vpop.f32.mrb[0].mxu0
        %v1083 = vadd.f32 %v356, %v1082
        %v1084 = vpop.f32.mrb[0].mxu0
        %v1085 = vpop.f32.mrb[0].mxu0
        %v1086 = vadd.f32 %v356, %v1085
        %v1087 = vpop.f32.mrb[0].mxu0
        %1088 = vmatprep.mubr.bf16.mxu0 %v681
        %1089 = vmatmul.mubr.bf16.gmra.mrb[0].mxu0 %v680
        %v1090 = vpop.f32.mrb[0].mxu0
        %v1091 = vadd.f32 %v356, %v1090
        %v1092 = vpop.f32.mrb[0].mxu0
        %v1093 = vpop.f32.mrb[0].mxu0
        %v1094 = vadd.f32 %v356, %v1093
        %v1095 = vpop.f32.mrb[0].mxu0
        %1096 = vmatprep.mubr.bf16.mxu0 %v683
        %1097 = vmatmul.mubr.bf16.gmra.mrb[0].mxu0 %v682
        %v1098 = vpop.f32.mrb[0].mxu0
        %v1099 = vadd.f32 %v356, %v1098
        %v1100 = vpop.f32.mrb[0].mxu0
        %v1101 = vpop.f32.mrb[0].mxu0
        %v1102 = vadd.f32 %v356, %v1101
        %v1103 = vpop.f32.mrb[0].mxu0
        %1104 = vmatprep.mubr.bf16.mxu0 %v685
        %1105 = vmatmul.mubr.bf16.gmra.mrb[0].mxu0 %v684
        %v1106 = vpop.f32.mrb[0].mxu0
        %v1107 = vadd.f32 %v356, %v1106
        %v1108 = vpop.f32.mrb[0].mxu0
        %v1109 = vpop.f32.mrb[0].mxu0
        %v1110 = vadd.f32 %v356, %v1109
        %v1111 = vpop.f32.mrb[0].mxu0
        %1112 = vmatprep.mubr.bf16.mxu0 %v687
        %1113 = vmatmul.mubr.bf16.gmra.mrb[0].mxu0 %v686
        %v1114 = vpop.f32.mrb[0].mxu0
        %v1115 = vadd.f32 %v356, %v1114
        %v1116 = vpop.f32.mrb[0].mxu0
        %v1117 = vpop.f32.mrb[0].mxu0
        %v1118 = vadd.f32 %v356, %v1117
        %v1119 = vpop.f32.mrb[0].mxu0
        %1120 = vmatprep.mubr.bf16.mxu0 %v689
        %1121 = vmatmul.mubr.bf16.gmra.mrb[0].mxu0 %v688
        %v1122 = vpop.f32.mrb[0].mxu0
        %v1123 = vadd.f32 %v356, %v1122
        %v1124 = vpop.f32.mrb[0].mxu0
        %v1125 = vpop.f32.mrb[0].mxu0
        %v1126 = vadd.f32 %v356, %v1125
        %v1127 = vpop.f32.mrb[0].mxu0
        %1128 = vmatprep.mubr.bf16.mxu0 %v691
        %1129 = vmatmul.mubr.bf16.gmra.mrb[0].mxu0 %v690
        %v1130 = vpop.f32.mrb[0].mxu0
        %v1131 = vadd.f32 %v356, %v1130
        %v1132 = vpop.f32.mrb[0].mxu0
        %v1133 = vpop.f32.mrb[0].mxu0
        %v1134 = vadd.f32 %v356, %v1133
        %v1135 = vpop.f32.mrb[0].mxu0
        %1136 = vmatprep.mubr.bf16.mxu0 %v693
        %1137 = vmatmul.mubr.bf16.gmra.mrb[0].mxu0 %v692
        %v1138 = vpop.f32.mrb[0].mxu0
        %v1139 = vadd.f32 %v356, %v1138
        %v1140 = vpop.f32.mrb[0].mxu0
        %v1141 = vpop.f32.mrb[0].mxu0
        %v1142 = vadd.f32 %v356, %v1141
        %v1143 = vpop.f32.mrb[0].mxu0
        %1144 = vmatprep.mubr.bf16.mxu0 %v695
        %1145 = vmatmul.mubr.bf16.gmra.mrb[0].mxu0 %v694
        %v1146 = vpop.f32.mrb[0].mxu0
        %v1147 = vadd.f32 %v356, %v1146
        %v1148 = vpop.f32.mrb[0].mxu0
        %v1149 = vpop.f32.mrb[0].mxu0
        %v1150 = vadd.f32 %v356, %v1149
        %v1151 = vpop.f32.mrb[0].mxu0
        %1152 = vmatprep.mubr.bf16.mxu0 %v697
        %1153 = vmatmul.mubr.bf16.gmra.mrb[0].mxu0 %v696
        %v1154 = vpop.f32.mrb[0].mxu0
        %v1155 = vadd.f32 %v356, %v1154
        %v1156 = vpop.f32.mrb[0].mxu0
        %v1157 = vpop.f32.mrb[0].mxu0
        %v1158 = vadd.f32 %v356, %v1157
        %v1159 = vpop.f32.mrb[0].mxu0
        %1160 = vmatprep.mubr.bf16.mxu0 %v699
        %1161 = vmatmul.mubr.bf16.gmra.mrb[0].mxu0 %v698
        %v1162 = vpop.f32.mrb[0].mxu0
        %v1163 = vadd.f32 %v356, %v1162
        %v1164 = vpop.f32.mrb[0].mxu0
        %v1165 = vpop.f32.mrb[0].mxu0
        %v1166 = vadd.f32 %v356, %v1165
        %v1167 = vpop.f32.mrb[0].mxu0
        %1168 = vmatprep.mubr.bf16.mxu0 %v701
        %1169 = vmatmul.mubr.bf16.gmra.mrb[0].mxu0 %v700
        %v1170 = vpop.f32.mrb[0].mxu0
        %v1171 = vadd.f32 %v356, %v1170
        %v1172 = vpop.f32.mrb[0].mxu0
        %v1173 = vpop.f32.mrb[0].mxu0
        %v1174 = vadd.f32 %v356, %v1173
        %v1175 = vpop.f32.mrb[0].mxu0
        %1176 = vmatprep.mubr.bf16.mxu0 %v703
        %1177 = vmatmul.mubr.bf16.gmra.mrb[0].mxu0 %v702
        %v1178 = vpop.f32.mrb[0].mxu0
        %v1179 = vadd.f32 %v356, %v1178
        %v1180 = vpop.f32.mrb[0].mxu0
        %v1181 = vpop.f32.mrb[0].mxu0
        %v1182 = vadd.f32 %v356, %v1181
        %v1183 = vpop.f32.mrb[0].mxu0
        %1184 = vmatprep.mubr.bf16.mxu0 %v705
        %1185 = vmatmul.mubr.bf16.gmra.mrb[0].mxu0 %v704
        %v1186 = vpop.f32.mrb[0].mxu0
        %v1187 = vadd.f32 %v356, %v1186
        %v1188 = vpop.f32.mrb[0].mxu0
        %v1189 = vpop.f32.mrb[0].mxu0
        %v1190 = vadd.f32 %v356, %v1189
        %v1191 = vpop.f32.mrb[0].mxu0
        %1192 = vmatprep.mubr.bf16.mxu0 %v707
        %1193 = vmatmul.mubr.bf16.gmra.mrb[0].mxu0 %v706
        %v1194 = vpop.f32.mrb[0].mxu0
        %v1195 = vadd.f32 %v356, %v1194
        %v1196 = vpop.f32.mrb[0].mxu0
        %v1197 = vpop.f32.mrb[0].mxu0
        %v1198 = vadd.f32 %v356, %v1197
        %v1199 = vpop.f32.mrb[0].mxu0
        %1200 = vmatprep.mubr.bf16.mxu0 %v709
        %1201 = vmatmul.mubr.bf16.gmra.mrb[0].mxu0 %v708
        %v1202 = vpop.f32.mrb[0].mxu0
        %v1203 = vadd.f32 %v356, %v1202
        %v1204 = vpop.f32.mrb[0].mxu0
        %v1205 = vpop.f32.mrb[0].mxu0
        %v1206 = vadd.f32 %v356, %v1205
        %v1207 = vpop.f32.mrb[0].mxu0
        %1208 = vmatprep.mubr.bf16.mxu0 %v711
        %1209 = vmatmul.mubr.bf16.gmra.mrb[0].mxu0 %v710
        %v1210 = vpop.f32.mrb[0].mxu0
        %v1211 = vadd.f32 %v356, %v1210
        %v1212 = vpop.f32.mrb[0].mxu0
        %v1213 = vpop.f32.mrb[0].mxu0
        %v1214 = vadd.f32 %v356, %v1213
        %v1215 = vpop.f32.mrb[0].mxu0
        %1216 = vmatprep.mubr.bf16.mxu0 %v713
        %1217 = vmatmul.mubr.bf16.gmra.mrb[0].mxu0 %v712
        %v1218 = vpop.f32.mrb[0].mxu0
        %v1219 = vadd.f32 %v356, %v1218
        %v1220 = vpop.f32.mrb[0].mxu0
        %v1221 = vpop.f32.mrb[0].mxu0
        %v1222 = vadd.f32 %v356, %v1221
        %v1223 = vpop.f32.mrb[0].mxu0
        %1224 = vmatprep.mubr.bf16.mxu0 %v715
        %1225 = vmatmul.mubr.bf16.gmra.mrb[0].mxu0 %v714
        %v1226 = vpop.f32.mrb[0].mxu0
        %v1227 = vadd.f32 %v356, %v1226
        %v1228 = vpop.f32.mrb[0].mxu0
        %v1229 = vpop.f32.mrb[0].mxu0
        %v1230 = vadd.f32 %v356, %v1229
        %v1231 = vpop.f32.mrb[0].mxu0
        %1232 = vmatprep.mubr.bf16.mxu0 %v717
        %1233 = vmatmul.mubr.bf16.gmra.mrb[0].mxu0 %v716
        %v1234 = vpop.f32.mrb[0].mxu0
        %v1235 = vadd.f32 %v356, %v1234
        %v1236 = vpop.f32.mrb[0].mxu0
        %v1237 = vpop.f32.mrb[0].mxu0
        %v1238 = vadd.f32 %v356, %v1237
        %v1239 = vpop.f32.mrb[0].mxu0
        %1240 = vmatprep.mubr.bf16.mxu0 %v719
        %1241 = vmatmul.mubr.bf16.gmra.mrb[0].mxu0 %v718
        %v1242 = vpop.f32.mrb[0].mxu0
        %v1243 = vadd.f32 %v356, %v1242
        %v1244 = vpop.f32.mrb[0].mxu0
        %v1245 = vpop.f32.mrb[0].mxu0
        %v1246 = vadd.f32 %v356, %v1245
        %v1247 = vpop.f32.mrb[0].mxu0
        %1248 = vmatprep.mubr.bf16.mxu0 %v721
        %1249 = vmatmul.mubr.bf16.gmra.mrb[0].mxu0 %v720
        %v1250 = vpop.f32.mrb[0].mxu0
        %v1251 = vadd.f32 %v356, %v1250
        %v1252 = vpop.f32.mrb[0].mxu0
        %v1253 = vpop.f32.mrb[0].mxu0
        %v1254 = vadd.f32 %v356, %v1253
        %v1255 = vpop.f32.mrb[0].mxu0
        %1256 = vmatprep.mubr.bf16.mxu0 %v723
        %1257 = vmatmul.mubr.bf16.gmra.mrb[0].mxu0 %v722
        %v1258 = vpop.f32.mrb[0].mxu0
        %v1259 = vadd.f32 %v356, %v1258
        %v1260 = vpop.f32.mrb[0].mxu0
        %v1261 = vpop.f32.mrb[0].mxu0
        %v1262 = vadd.f32 %v356, %v1261
        %v1263 = vpop.f32.mrb[0].mxu0
        %1264 = vmatprep.mubr.bf16.mxu0 %v725
        %1265 = vmatmul.mubr.bf16.gmra.mrb[0].mxu0 %v724
        %v1266 = vpop.f32.mrb[0].mxu0
        %v1267 = vadd.f32 %v356, %v1266
        %v1268 = vpop.f32.mrb[0].mxu0
        %v1269 = vpop.f32.mrb[0].mxu0
        %v1270 = vadd.f32 %v356, %v1269
        %v1271 = vpop.f32.mrb[0].mxu0
        %1272 = vmatprep.mubr.bf16.mxu0 %v727
        %1273 = vmatmul.mubr.bf16.gmra.mrb[0].mxu0 %v726
        %v1274 = vpop.f32.mrb[0].mxu0
        %v1275 = vadd.f32 %v356, %v1274
        %v1276 = vpop.f32.mrb[0].mxu0
        %v1277 = vpop.f32.mrb[0].mxu0
        %v1278 = vadd.f32 %v356, %v1277
        %v1279 = vpop.f32.mrb[0].mxu0
        %1280 = vmatprep.mubr.bf16.mxu0 %v729
        %1281 = vmatmul.mubr.bf16.gmra.mrb[0].mxu0 %v728
        %v1282 = vpop.f32.mrb[0].mxu0
        %v1283 = vadd.f32 %v356, %v1282
        %v1284 = vpop.f32.mrb[0].mxu0
        %v1285 = vpop.f32.mrb[0].mxu0
        %v1286 = vadd.f32 %v356, %v1285
        %v1287 = vpop.f32.mrb[0].mxu0
        %1288 = vmatprep.mubr.bf16.mxu0 %v731
        %1289 = vmatmul.mubr.bf16.gmra.mrb[0].mxu0 %v730
        %v1290 = vpop.f32.mrb[0].mxu0
        %v1291 = vadd.f32 %v356, %v1290
        %v1292 = vpop.f32.mrb[0].mxu0
        %v1293 = vpop.f32.mrb[0].mxu0
        %v1294 = vadd.f32 %v356, %v1293
        %v1295 = vpop.f32.mrb[0].mxu0
        %1296 = vmatprep.mubr.bf16.mxu0 %v733
        %1297 = vmatmul.mubr.bf16.gmra.mrb[0].mxu0 %v732
        %v1298 = vpop.f32.mrb[0].mxu0
        %v1299 = vadd.f32 %v356, %v1298
        %v1300 = vpop.f32.mrb[0].mxu0
        %v1301 = vpop.f32.mrb[0].mxu0
        %v1302 = vadd.f32 %v356, %v1301
        %v1303 = vpop.f32.mrb[0].mxu0
        %1304 = vmatprep.mubr.bf16.mxu0 %v735
        %1305 = vmatmul.mubr.bf16.gmra.mrb[0].mxu0 %v734
        %v1306 = vpop.f32.mrb[0].mxu0
        %v1307 = vadd.f32 %v356, %v1306
        %v1308 = vpop.f32.mrb[0].mxu0
        %v1309 = vpop.f32.mrb[0].mxu0
        %v1310 = vadd.f32 %v356, %v1309
        %v1311 = vpop.f32.mrb[0].mxu0
        %1312 = vmatprep.mubr.bf16.mxu0 %v737
        %1313 = vmatmul.mubr.bf16.gmra.mrb[0].mxu0 %v736
        %v1314 = vpop.f32.mrb[0].mxu0
        %v1315 = vadd.f32 %v356, %v1314
        %v1316 = vpop.f32.mrb[0].mxu0
        %v1317 = vpop.f32.mrb[0].mxu0
        %v1318 = vadd.f32 %v356, %v1317
        %v1319 = vpop.f32.mrb[0].mxu0
        %1320 = vmatprep.mubr.bf16.mxu0 %v739
        %1321 = vmatmul.mubr.bf16.gmra.mrb[0].mxu0 %v738
        %v1322 = vpop.f32.mrb[0].mxu0
        %v1323 = vadd.f32 %v356, %v1322
        %v1324 = vpop.f32.mrb[0].mxu0
        %v1325 = vpop.f32.mrb[0].mxu0
        %v1326 = vadd.f32 %v356, %v1325
        %v1327 = vpop.f32.mrb[0].mxu0
        %1328 = vmatprep.mubr.bf16.mxu0 %v741
        %1329 = vmatmul.mubr.bf16.gmra.mrb[0].mxu0 %v740
        %v1330 = vpop.f32.mrb[0].mxu0
        %v1331 = vadd.f32 %v356, %v1330
        %v1332 = vpop.f32.mrb[0].mxu0
        %v1333 = vpop.f32.mrb[0].mxu0
        %v1334 = vadd.f32 %v356, %v1333
        %v1335 = vpop.f32.mrb[0].mxu0
        %1336 = vmatprep.mubr.bf16.mxu0 %v743
        %1337 = vmatmul.mubr.bf16.gmra.mrb[0].mxu0 %v742
        %v1338 = vpop.f32.mrb[0].mxu0
        %v1339 = vadd.f32 %v356, %v1338
        %v1340 = vpop.f32.mrb[0].mxu0
        %v1341 = vpop.f32.mrb[0].mxu0
        %v1342 = vadd.f32 %v356, %v1341
        %v1343 = vpop.f32.mrb[0].mxu0
        %1344 = vmatprep.mubr.bf16.mxu0 %v745
        %1345 = vmatmul.mubr.bf16.gmra.mrb[0].mxu0 %v744
        %v1346 = vpop.f32.mrb[0].mxu0
        %v1347 = vadd.f32 %v356, %v1346
        %v1348 = vpop.f32.mrb[0].mxu0
        %v1349 = vpop.f32.mrb[0].mxu0
        %v1350 = vadd.f32 %v356, %v1349
        %v1351 = vpop.f32.mrb[0].mxu0
        %1352 = vmatprep.mubr.bf16.mxu0 %v747
        %1353 = vmatmul.mubr.bf16.gmra.mrb[0].mxu0 %v746
        %v1354 = vpop.f32.mrb[0].mxu0
        %v1355 = vadd.f32 %v356, %v1354
        %v1356 = vpop.f32.mrb[0].mxu0
        %v1357 = vpop.f32.mrb[0].mxu0
        %v1358 = vadd.f32 %v356, %v1357
        %v1359 = vpop.f32.mrb[0].mxu0
        %1360 = vmatprep.mubr.bf16.mxu0 %v749
        %1361 = vmatmul.mubr.bf16.gmra.mrb[0].mxu0 %v748
        %v1362 = vpop.f32.mrb[0].mxu0
        %v1363 = vadd.f32 %v356, %v1362
        %v1364 = vpop.f32.mrb[0].mxu0
        %v1365 = vpop.f32.mrb[0].mxu0
        %v1366 = vadd.f32 %v356, %v1365
        %v1367 = vpop.f32.mrb[0].mxu0
        %1368 = vdwg.mxu0
        %v1369 = vmax.f32 %v979, 0.0
        %v1370 = vmax.f32 %v982, 0.0
        %v1371 = vmax.f32 %v987, 0.0
        %v1372 = vmax.f32 %v990, 0.0
        %v1373 = vmax.f32 %v995, 0.0
        %v1374 = vmax.f32 %v998, 0.0
        %v1375 = vmax.f32 %v1003, 0.0
        %v1376 = vmax.f32 %v1006, 0.0
        %v1377 = vmax.f32 %v1011, 0.0
        %v1378 = vmax.f32 %v1014, 0.0
        %v1379 = vmax.f32 %v1019, 0.0
        %v1380 = vmax.f32 %v1022, 0.0
        %v1381 = vmax.f32 %v1027, 0.0
        %v1382 = vmax.f32 %v1030, 0.0
        %v1383 = vmax.f32 %v1035, 0.0
        %v1384 = vmax.f32 %v1038, 0.0
        %v1385 = vmax.f32 %v1043, 0.0
        %v1386 = vmax.f32 %v1046, 0.0
        %v1387 = vmax.f32 %v1051, 0.0
        %v1388 = vmax.f32 %v1054, 0.0
        %v1389 = vmax.f32 %v1059, 0.0
        %v1390 = vmax.f32 %v1062, 0.0
        %v1391 = vmax.f32 %v1067, 0.0
        %v1392 = vmax.f32 %v1070, 0.0
        %v1393 = vmax.f32 %v1075, 0.0
        %v1394 = vmax.f32 %v1078, 0.0
        %v1395 = vmax.f32 %v1083, 0.0
        %v1396 = vmax.f32 %v1086, 0.0
        %v1397 = vmax.f32 %v1091, 0.0
        %v1398 = vmax.f32 %v1094, 0.0
        %v1399 = vmax.f32 %v1099, 0.0
        %v1400 = vmax.f32 %v1102, 0.0
        %v1401 = vmax.f32 %v1107, 0.0
        %v1402 = vmax.f32 %v1110, 0.0
        %v1403 = vmax.f32 %v1115, 0.0
        %v1404 = vmax.f32 %v1118, 0.0
        %v1405 = vmax.f32 %v1123, 0.0
        %v1406 = vmax.f32 %v1126, 0.0
        %v1407 = vmax.f32 %v1131, 0.0
        %v1408 = vmax.f32 %v1134, 0.0
        %v1409 = vmax.f32 %v1139, 0.0
        %v1410 = vmax.f32 %v1142, 0.0
        %v1411 = vmax.f32 %v1147, 0.0
        %v1412 = vmax.f32 %v1150, 0.0
        %v1413 = vmax.f32 %v1155, 0.0
        %v1414 = vmax.f32 %v1158, 0.0
        %v1415 = vmax.f32 %v1163, 0.0
        %v1416 = vmax.f32 %v1166, 0.0
        %v1417 = vmax.f32 %v1171, 0.0
        %v1418 = vmax.f32 %v1174, 0.0
        %v1419 = vmax.f32 %v1179, 0.0
        %v1420 = vmax.f32 %v1182, 0.0
        %v1421 = vmax.f32 %v1187, 0.0
        %v1422 = vmax.f32 %v1190, 0.0
        %v1423 = vmax.f32 %v1195, 0.0
        %v1424 = vmax.f32 %v1198, 0.0
        %v1425 = vmax.f32 %v1203, 0.0
        %v1426 = vmax.f32 %v1206, 0.0
        %v1427 = vmax.f32 %v1211, 0.0
        %v1428 = vmax.f32 %v1214, 0.0
        %v1429 = vmax.f32 %v1219, 0.0
        %v1430 = vmax.f32 %v1222, 0.0
        %v1431 = vmax.f32 %v1227, 0.0
        %v1432 = vmax.f32 %v1230, 0.0
        %v1433 = vmax.f32 %v1235, 0.0
        %v1434 = vmax.f32 %v1238, 0.0
        %v1435 = vmax.f32 %v1243, 0.0
        %v1436 = vmax.f32 %v1246, 0.0
        %v1437 = vmax.f32 %v1251, 0.0
        %v1438 = vmax.f32 %v1254, 0.0
        %v1439 = vmax.f32 %v1259, 0.0
        %v1440 = vmax.f32 %v1262, 0.0
        %v1441 = vmax.f32 %v1267, 0.0
        %v1442 = vmax.f32 %v1270, 0.0
        %v1443 = vmax.f32 %v1275, 0.0
        %v1444 = vmax.f32 %v1278, 0.0
        %v1445 = vmax.f32 %v1283, 0.0
        %v1446 = vmax.f32 %v1286, 0.0
        %v1447 = vmax.f32 %v1291, 0.0
        %v1448 = vmax.f32 %v1294, 0.0
        %v1449 = vmax.f32 %v1299, 0.0
        %v1450 = vmax.f32 %v1302, 0.0
        %v1451 = vmax.f32 %v1307, 0.0
        %v1452 = vmax.f32 %v1310, 0.0
        %v1453 = vmax.f32 %v1315, 0.0
        %v1454 = vmax.f32 %v1318, 0.0
        %v1455 = vmax.f32 %v1323, 0.0
        %v1456 = vmax.f32 %v1326, 0.0
        %v1457 = vmax.f32 %v1331, 0.0
        %v1458 = vmax.f32 %v1334, 0.0
        %v1459 = vmax.f32 %v1339, 0.0
        %v1460 = vmax.f32 %v1342, 0.0
        %v1461 = vmax.f32 %v1347, 0.0
        %v1462 = vmax.f32 %v1350, 0.0
        %v1463 = vmax.f32 %v1355, 0.0
        %v1464 = vmax.f32 %v1358, 0.0
        %v1465 = vmax.f32 %v1363, 0.0
        %v1466 = vmax.f32 %v1366, 0.0
        %v1467 = vpack.c.bf16 %v1370, %v1369
        %v1468 = vpack.c.bf16 %v1372, %v1371
        %v1469 = vpack.c.bf16 %v1374, %v1373
        %v1470 = vpack.c.bf16 %v1376, %v1375
        %v1471 = vpack.c.bf16 %v1378, %v1377
        %v1472 = vpack.c.bf16 %v1380, %v1379
        %v1473 = vpack.c.bf16 %v1382, %v1381
        %v1474 = vpack.c.bf16 %v1384, %v1383
        %v1475 = vpack.c.bf16 %v1386, %v1385
        %v1476 = vpack.c.bf16 %v1388, %v1387
        %v1477 = vpack.c.bf16 %v1390, %v1389
        %v1478 = vpack.c.bf16 %v1392, %v1391
        %v1479 = vpack.c.bf16 %v1394, %v1393
        %v1480 = vpack.c.bf16 %v1396, %v1395
        %v1481 = vpack.c.bf16 %v1398, %v1397
        %v1482 = vpack.c.bf16 %v1400, %v1399
        %v1483 = vpack.c.bf16 %v1402, %v1401
        %v1484 = vpack.c.bf16 %v1404, %v1403
        %v1485 = vpack.c.bf16 %v1406, %v1405
        %v1486 = vpack.c.bf16 %v1408, %v1407
        %v1487 = vpack.c.bf16 %v1410, %v1409
        %v1488 = vpack.c.bf16 %v1412, %v1411
        %v1489 = vpack.c.bf16 %v1414, %v1413
        %v1490 = vpack.c.bf16 %v1416, %v1415
        %v1491 = vpack.c.bf16 %v1418, %v1417
        %v1492 = vpack.c.bf16 %v1420, %v1419
        %v1493 = vpack.c.bf16 %v1422, %v1421
        %v1494 = vpack.c.bf16 %v1424, %v1423
        %v1495 = vpack.c.bf16 %v1426, %v1425
        %v1496 = vpack.c.bf16 %v1428, %v1427
        %v1497 = vpack.c.bf16 %v1430, %v1429
        %v1498 = vpack.c.bf16 %v1432, %v1431
        %v1499 = vpack.c.bf16 %v1434, %v1433
        %v1500 = vpack.c.bf16 %v1436, %v1435
        %v1501 = vpack.c.bf16 %v1438, %v1437
        %v1502 = vpack.c.bf16 %v1440, %v1439
        %v1503 = vpack.c.bf16 %v1442, %v1441
        %v1504 = vpack.c.bf16 %v1444, %v1443
        %v1505 = vpack.c.bf16 %v1446, %v1445
        %v1506 = vpack.c.bf16 %v1448, %v1447
        %v1507 = vpack.c.bf16 %v1450, %v1449
        %v1508 = vpack.c.bf16 %v1452, %v1451
        %v1509 = vpack.c.bf16 %v1454, %v1453
        %v1510 = vpack.c.bf16 %v1456, %v1455
        %v1511 = vpack.c.bf16 %v1458, %v1457
        %v1512 = vpack.c.bf16 %v1460, %v1459
        %v1513 = vpack.c.bf16 %v1462, %v1461
        %v1514 = vpack.c.bf16 %v1464, %v1463
        %v1515 = vpack.c.bf16 %v1466, %v1465
        %v1565 = vunpack.c.l.b16 %v1467
        %v1566 = vunpack.c.h.b16 %v1467
        %v1567 = vunpack.c.l.b16 %v1468
        %v1568 = vunpack.c.h.b16 %v1468
        %v1569 = vunpack.c.l.b16 %v1469
        %v1570 = vunpack.c.h.b16 %v1469
        %v1571 = vunpack.c.l.b16 %v1470
        %v1572 = vunpack.c.h.b16 %v1470
        %v1573 = vunpack.c.l.b16 %v1471
        %v1574 = vunpack.c.h.b16 %v1471
        %v1575 = vunpack.c.l.b16 %v1472
        %v1576 = vunpack.c.h.b16 %v1472
        %v1577 = vunpack.c.l.b16 %v1473
        %v1578 = vunpack.c.h.b16 %v1473
        %v1579 = vunpack.c.l.b16 %v1474
        %v1580 = vunpack.c.h.b16 %v1474
        %v1581 = vunpack.c.l.b16 %v1475
        %v1582 = vunpack.c.h.b16 %v1475
        %v1583 = vunpack.c.l.b16 %v1476
        %v1584 = vunpack.c.h.b16 %v1476
        %v1585 = vunpack.c.l.b16 %v1477
        %v1586 = vunpack.c.h.b16 %v1477
        %v1587 = vunpack.c.l.b16 %v1478
        %v1588 = vunpack.c.h.b16 %v1478
        %v1589 = vunpack.c.l.b16 %v1479
        %v1590 = vunpack.c.h.b16 %v1479
        %v1591 = vunpack.c.l.b16 %v1480
        %v1592 = vunpack.c.h.b16 %v1480
        %v1593 = vunpack.c.l.b16 %v1481
        %v1594 = vunpack.c.h.b16 %v1481
        %v1595 = vunpack.c.l.b16 %v1482
        %v1596 = vunpack.c.h.b16 %v1482
        %v1597 = vunpack.c.l.b16 %v1483
        %v1598 = vunpack.c.h.b16 %v1483
        %v1599 = vunpack.c.l.b16 %v1484
        %v1600 = vunpack.c.h.b16 %v1484
        %v1601 = vunpack.c.l.b16 %v1485
        %v1602 = vunpack.c.h.b16 %v1485
        %v1603 = vunpack.c.l.b16 %v1486
        %v1604 = vunpack.c.h.b16 %v1486
        %v1605 = vunpack.c.l.b16 %v1487
        %v1606 = vunpack.c.h.b16 %v1487
        %v1607 = vunpack.c.l.b16 %v1488
        %v1608 = vunpack.c.h.b16 %v1488
        %v1609 = vunpack.c.l.b16 %v1489
        %v1610 = vunpack.c.h.b16 %v1489
        %v1611 = vunpack.c.l.b16 %v1490
        %v1612 = vunpack.c.h.b16 %v1490
        %v1613 = vunpack.c.l.b16 %v1491
        %v1614 = vunpack.c.h.b16 %v1491
        %v1615 = vunpack.c.l.b16 %v1492
        %v1616 = vunpack.c.h.b16 %v1492
        %v1617 = vunpack.c.l.b16 %v1493
        %v1618 = vunpack.c.h.b16 %v1493
        %v1619 = vunpack.c.l.b16 %v1494
        %v1620 = vunpack.c.h.b16 %v1494
        %v1621 = vunpack.c.l.b16 %v1495
        %v1622 = vunpack.c.h.b16 %v1495
        %v1623 = vunpack.c.l.b16 %v1496
        %v1624 = vunpack.c.h.b16 %v1496
        %v1625 = vunpack.c.l.b16 %v1497
        %v1626 = vunpack.c.h.b16 %v1497
        %v1627 = vunpack.c.l.b16 %v1498
        %v1628 = vunpack.c.h.b16 %v1498
        %v1629 = vunpack.c.l.b16 %v1499
        %v1630 = vunpack.c.h.b16 %v1499
        %v1631 = vunpack.c.l.b16 %v1500
        %v1632 = vunpack.c.h.b16 %v1500
        %v1633 = vunpack.c.l.b16 %v1501
        %v1634 = vunpack.c.h.b16 %v1501
        %v1635 = vunpack.c.l.b16 %v1502
        %v1636 = vunpack.c.h.b16 %v1502
        %v1637 = vunpack.c.l.b16 %v1503
        %v1638 = vunpack.c.h.b16 %v1503
        %v1639 = vunpack.c.l.b16 %v1504
        %v1640 = vunpack.c.h.b16 %v1504
        %v1641 = vunpack.c.l.b16 %v1505
        %v1642 = vunpack.c.h.b16 %v1505
        %v1643 = vunpack.c.l.b16 %v1506
        %v1644 = vunpack.c.h.b16 %v1506
        %v1645 = vunpack.c.l.b16 %v1507
        %v1646 = vunpack.c.h.b16 %v1507
        %v1647 = vunpack.c.l.b16 %v1508
        %v1648 = vunpack.c.h.b16 %v1508
        %v1649 = vunpack.c.l.b16 %v1509
        %v1650 = vunpack.c.h.b16 %v1509
        %v1651 = vunpack.c.l.b16 %v1510
        %v1652 = vunpack.c.h.b16 %v1510
        %v1653 = vunpack.c.l.b16 %v1511
        %v1654 = vunpack.c.h.b16 %v1511
        %v1655 = vunpack.c.l.b16 %v1512
        %v1656 = vunpack.c.h.b16 %v1512
        %v1657 = vunpack.c.l.b16 %v1513
        %v1658 = vunpack.c.h.b16 %v1513
        %v1659 = vunpack.c.l.b16 %v1514
        %v1660 = vunpack.c.h.b16 %v1514
        %v1661 = vunpack.c.l.b16 %v1515
        %v1662 = vunpack.c.h.b16 %v1515
        %v1663 = vpack.c.b16 %v1565, %v1565
        %v1664 = vpack.c.b16 %v1566, %v1566
        %v1665 = vpack.c.b16 %v1567, %v1567
        %v1666 = vpack.c.b16 %v1568, %v1568
        %v1667 = vpack.c.b16 %v1569, %v1569
        %v1668 = vpack.c.b16 %v1570, %v1570
        %v1669 = vpack.c.b16 %v1571, %v1571
        %v1670 = vpack.c.b16 %v1572, %v1572
        %v1671 = vpack.c.b16 %v1573, %v1573
        %v1672 = vpack.c.b16 %v1574, %v1574
        %v1673 = vpack.c.b16 %v1575, %v1575
        %v1674 = vpack.c.b16 %v1576, %v1576
        %v1675 = vpack.c.b16 %v1577, %v1577
        %v1676 = vpack.c.b16 %v1578, %v1578
        %v1677 = vpack.c.b16 %v1579, %v1579
        %v1678 = vpack.c.b16 %v1580, %v1580
        %v1679 = vpack.c.b16 %v1581, %v1581
        %v1680 = vpack.c.b16 %v1582, %v1582
        %v1681 = vpack.c.b16 %v1583, %v1583
        %v1682 = vpack.c.b16 %v1584, %v1584
        %v1683 = vpack.c.b16 %v1585, %v1585
        %v1684 = vpack.c.b16 %v1586, %v1586
        %v1685 = vpack.c.b16 %v1587, %v1587
        %v1686 = vpack.c.b16 %v1588, %v1588
        %v1687 = vpack.c.b16 %v1589, %v1589
        %v1688 = vpack.c.b16 %v1590, %v1590
        %v1689 = vpack.c.b16 %v1591, %v1591
        %v1690 = vpack.c.b16 %v1592, %v1592
        %v1691 = vpack.c.b16 %v1593, %v1593
        %v1692 = vpack.c.b16 %v1594, %v1594
        %v1693 = vpack.c.b16 %v1595, %v1595
        %v1694 = vpack.c.b16 %v1596, %v1596
        %v1695 = vpack.c.b16 %v1597, %v1597
        %v1696 = vpack.c.b16 %v1598, %v1598
        %v1697 = vpack.c.b16 %v1599, %v1599
        %v1698 = vpack.c.b16 %v1600, %v1600
        %v1699 = vpack.c.b16 %v1601, %v1601
        %v1700 = vpack.c.b16 %v1602, %v1602
        %v1701 = vpack.c.b16 %v1603, %v1603
        %v1702 = vpack.c.b16 %v1604, %v1604
        %v1703 = vpack.c.b16 %v1605, %v1605
        %v1704 = vpack.c.b16 %v1606, %v1606
        %v1705 = vpack.c.b16 %v1607, %v1607
        %v1706 = vpack.c.b16 %v1608, %v1608
        %v1707 = vpack.c.b16 %v1609, %v1609
        %v1708 = vpack.c.b16 %v1610, %v1610
        %v1709 = vpack.c.b16 %v1611, %v1611
        %v1710 = vpack.c.b16 %v1612, %v1612
        %v1711 = vpack.c.b16 %v1613, %v1613
        %v1712 = vpack.c.b16 %v1614, %v1614
        %v1713 = vpack.c.b16 %v1615, %v1615
        %v1714 = vpack.c.b16 %v1616, %v1616
        %v1715 = vpack.c.b16 %v1617, %v1617
        %v1716 = vpack.c.b16 %v1618, %v1618
        %v1717 = vpack.c.b16 %v1619, %v1619
        %v1718 = vpack.c.b16 %v1620, %v1620
        %v1719 = vpack.c.b16 %v1621, %v1621
        %v1720 = vpack.c.b16 %v1622, %v1622
        %v1721 = vpack.c.b16 %v1623, %v1623
        %v1722 = vpack.c.b16 %v1624, %v1624
        %v1723 = vpack.c.b16 %v1625, %v1625
        %v1724 = vpack.c.b16 %v1626, %v1626
        %v1725 = vpack.c.b16 %v1627, %v1627
        %v1726 = vpack.c.b16 %v1628, %v1628
        %v1727 = vpack.c.b16 %v1629, %v1629
        %v1728 = vpack.c.b16 %v1630, %v1630
        %v1729 = vpack.c.b16 %v1631, %v1631
        %v1730 = vpack.c.b16 %v1632, %v1632
        %v1731 = vpack.c.b16 %v1633, %v1633
        %v1732 = vpack.c.b16 %v1634, %v1634
        %v1733 = vpack.c.b16 %v1635, %v1635
        %v1734 = vpack.c.b16 %v1636, %v1636
        %v1735 = vpack.c.b16 %v1637, %v1637
        %v1736 = vpack.c.b16 %v1638, %v1638
        %v1737 = vpack.c.b16 %v1639, %v1639
        %v1738 = vpack.c.b16 %v1640, %v1640
        %v1739 = vpack.c.b16 %v1641, %v1641
        %v1740 = vpack.c.b16 %v1642, %v1642
        %v1741 = vpack.c.b16 %v1643, %v1643
        %v1742 = vpack.c.b16 %v1644, %v1644
        %v1743 = vpack.c.b16 %v1645, %v1645
        %v1744 = vpack.c.b16 %v1646, %v1646
        %v1745 = vpack.c.b16 %v1647, %v1647
        %v1746 = vpack.c.b16 %v1648, %v1648
        %v1747 = vpack.c.b16 %v1649, %v1649
        %v1748 = vpack.c.b16 %v1650, %v1650
        %v1749 = vpack.c.b16 %v1651, %v1651
        %v1750 = vpack.c.b16 %v1652, %v1652
        %v1751 = vpack.c.b16 %v1653, %v1653
        %v1752 = vpack.c.b16 %v1654, %v1654
        %v1753 = vpack.c.b16 %v1655, %v1655
        %v1754 = vpack.c.b16 %v1656, %v1656
        %v1755 = vpack.c.b16 %v1657, %v1657
        %v1756 = vpack.c.b16 %v1658, %v1658
        %v1757 = vpack.c.b16 %v1659, %v1659
        %v1758 = vpack.c.b16 %v1660, %v1660
        %v1759 = vpack.c.b16 %v1661, %v1661
        %v1760 = vpack.c.b16 %v1662, %v1662
        %1859 = vst [vmem:[%s204] sm:$0xf] %v1663
        %1860 = vst [vmem:[%s204 + $0x4] sm:$0xf] %v1664
        %1861 = vst [vmem:[%s204 + $0x8] sm:$0xf] %v1665
        %1862 = vst [vmem:[%s204 + $0xc] sm:$0xf] %v1666
        %1863 = vst [vmem:[%s204 + $0x10] sm:$0xf] %v1667
        %1864 = vst [vmem:[%s204 + $0x14] sm:$0xf] %v1668
        %1865 = vst [vmem:[%s204 + $0x18] sm:$0xf] %v1669
        %1866 = vst [vmem:[%s204 + $0x1c] sm:$0xf] %v1670
        %1867 = vst [vmem:[%s204 + $0x20] sm:$0xf] %v1671
        %1868 = vst [vmem:[%s204 + $0x24] sm:$0xf] %v1672
        %1869 = vst [vmem:[%s204 + $0x28] sm:$0xf] %v1673
        %1870 = vst [vmem:[%s204 + $0x2c] sm:$0xf] %v1674
        %1871 = vst [vmem:[%s204 + $0x30] sm:$0xf] %v1675
        %1872 = vst [vmem:[%s204 + $0x34] sm:$0xf] %v1676
        %1873 = vst [vmem:[%s204 + $0x38] sm:$0xf] %v1677
        %1874 = vst [vmem:[%s204 + $0x3c] sm:$0xf] %v1678
        %1875 = vst [vmem:[%s204 + $0x40] sm:$0xf] %v1679
        %1876 = vst [vmem:[%s204 + $0x44] sm:$0xf] %v1680
        %1877 = vst [vmem:[%s204 + $0x48] sm:$0xf] %v1681
        %1878 = vst [vmem:[%s204 + $0x4c] sm:$0xf] %v1682
        %1879 = vst [vmem:[%s204 + $0x50] sm:$0xf] %v1683
        %1880 = vst [vmem:[%s204 + $0x54] sm:$0xf] %v1684
        %1881 = vst [vmem:[%s204 + $0x58] sm:$0xf] %v1685
        %1882 = vst [vmem:[%s204 + $0x5c] sm:$0xf] %v1686
        %1883 = vst [vmem:[%s204 + $0x60] sm:$0xf] %v1687
        %1884 = vst [vmem:[%s204 + $0x64] sm:$0xf] %v1688
        %1885 = vst [vmem:[%s204 + $0x68] sm:$0xf] %v1689
        %1886 = vst [vmem:[%s204 + $0x6c] sm:$0xf] %v1690
        %1887 = vst [vmem:[%s204 + $0x70] sm:$0xf] %v1691
        %1888 = vst [vmem:[%s204 + $0x74] sm:$0xf] %v1692
        %1889 = vst [vmem:[%s204 + $0x78] sm:$0xf] %v1693
        %1890 = vst [vmem:[%s204 + $0x7c] sm:$0xf] %v1694
        %1891 = vst [vmem:[%s204 + $0x80] sm:$0xf] %v1695
        %1892 = vst [vmem:[%s204 + $0x84] sm:$0xf] %v1696
        %1893 = vst [vmem:[%s204 + $0x88] sm:$0xf] %v1697
        %1894 = vst [vmem:[%s204 + $0x8c] sm:$0xf] %v1698
        %1895 = vst [vmem:[%s204 + $0x90] sm:$0xf] %v1699
        %1896 = vst [vmem:[%s204 + $0x94] sm:$0xf] %v1700
        %1897 = vst [vmem:[%s204 + $0x98] sm:$0xf] %v1701
        %1898 = vst [vmem:[%s204 + $0x9c] sm:$0xf] %v1702
        %1899 = vst [vmem:[%s204 + $0xa0] sm:$0xf] %v1703
        %1900 = vst [vmem:[%s204 + $0xa4] sm:$0xf] %v1704
        %1901 = vst [vmem:[%s204 + $0xa8] sm:$0xf] %v1705
        %1902 = vst [vmem:[%s204 + $0xac] sm:$0xf] %v1706
        %1903 = vst [vmem:[%s204 + $0xb0] sm:$0xf] %v1707
        %1904 = vst [vmem:[%s204 + $0xb4] sm:$0xf] %v1708
        %1905 = vst [vmem:[%s204 + $0xb8] sm:$0xf] %v1709
        %1906 = vst [vmem:[%s204 + $0xbc] sm:$0xf] %v1710
        %1907 = vst [vmem:[%s204 + $0xc0] sm:$0xf] %v1711
        %1908 = vst [vmem:[%s204 + $0xc4] sm:$0xf] %v1712
        %1909 = vst [vmem:[%s204 + $0xc8] sm:$0xf] %v1713
        %1910 = vst [vmem:[%s204 + $0xcc] sm:$0xf] %v1714
        %1911 = vst [vmem:[%s204 + $0xd0] sm:$0xf] %v1715
        %1912 = vst [vmem:[%s204 + $0xd4] sm:$0xf] %v1716
        %1913 = vst [vmem:[%s204 + $0xd8] sm:$0xf] %v1717
        %1914 = vst [vmem:[%s204 + $0xdc] sm:$0xf] %v1718
        %1915 = vst [vmem:[%s204 + $0xe0] sm:$0xf] %v1719
        %1916 = vst [vmem:[%s204 + $0xe4] sm:$0xf] %v1720
        %1917 = vst [vmem:[%s204 + $0xe8] sm:$0xf] %v1721
        %1918 = vst [vmem:[%s204 + $0xec] sm:$0xf] %v1722
        %1919 = vst [vmem:[%s204 + $0xf0] sm:$0xf] %v1723
        %1920 = vst [vmem:[%s204 + $0xf4] sm:$0xf] %v1724
        %1921 = vst [vmem:[%s204 + $0xf8] sm:$0xf] %v1725
        %1922 = vst [vmem:[%s204 + $0xfc] sm:$0xf] %v1726
        %1923 = vst [vmem:[%s204 + $0x100] sm:$0xf] %v1727
        %1924 = vst [vmem:[%s204 + $0x104] sm:$0xf] %v1728
        %1925 = vst [vmem:[%s204 + $0x108] sm:$0xf] %v1729
        %1926 = vst [vmem:[%s204 + $0x10c] sm:$0xf] %v1730
        %1927 = vst [vmem:[%s204 + $0x110] sm:$0xf] %v1731
        %1928 = vst [vmem:[%s204 + $0x114] sm:$0xf] %v1732
        %1929 = vst [vmem:[%s204 + $0x118] sm:$0xf] %v1733
        %1930 = vst [vmem:[%s204 + $0x11c] sm:$0xf] %v1734
        %1931 = vst [vmem:[%s204 + $0x120] sm:$0xf] %v1735
        %1932 = vst [vmem:[%s204 + $0x124] sm:$0xf] %v1736
        %1933 = vst [vmem:[%s204 + $0x128] sm:$0xf] %v1737
        %1934 = vst [vmem:[%s204 + $0x12c] sm:$0xf] %v1738
        %1935 = vst [vmem:[%s204 + $0x130] sm:$0xf] %v1739
        %1936 = vst [vmem:[%s204 + $0x134] sm:$0xf] %v1740
        %1937 = vst [vmem:[%s204 + $0x138] sm:$0xf] %v1741
        %1938 = vst [vmem:[%s204 + $0x13c] sm:$0xf] %v1742
        %1939 = vst [vmem:[%s204 + $0x140] sm:$0xf] %v1743
        %1940 = vst [vmem:[%s204 + $0x144] sm:$0xf] %v1744
        %1941 = vst [vmem:[%s204 + $0x148] sm:$0xf] %v1745
        %1942 = vst [vmem:[%s204 + $0x14c] sm:$0xf] %v1746
        %1943 = vst [vmem:[%s204 + $0x150] sm:$0xf] %v1747
        %1944 = vst [vmem:[%s204 + $0x154] sm:$0xf] %v1748
        %1945 = vst [vmem:[%s204 + $0x158] sm:$0xf] %v1749
        %1946 = vst [vmem:[%s204 + $0x15c] sm:$0xf] %v1750
        %1947 = vst [vmem:[%s204 + $0x160] sm:$0xf] %v1751
        %1948 = vst [vmem:[%s204 + $0x164] sm:$0xf] %v1752
        %1949 = vst [vmem:[%s204 + $0x168] sm:$0xf] %v1753
        %1950 = vst [vmem:[%s204 + $0x16c] sm:$0xf] %v1754
        %1951 = vst [vmem:[%s204 + $0x170] sm:$0xf] %v1755
        %1952 = vst [vmem:[%s204 + $0x174] sm:$0xf] %v1756
        %1953 = vst [vmem:[%s204 + $0x178] sm:$0xf] %v1757
        %1954 = vst [vmem:[%s204 + $0x17c] sm:$0xf] %v1758
        %1955 = vst [vmem:[%s204 + $0x180] sm:$0xf] %v1759
        %1956 = vst [vmem:[%s204 + $0x184] sm:$0xf] %v1760
        %s1957 = sand.u32 %s117, 1
        %s1958 = scalar_lea.sflag [#allocation3], %s1957
        %s1959 = sand.u32 %s117, 1
        %s1960 = smul.addr %s1959, 392
        %s1961 = scalar_lea.vmem [#allocation2], %s1960
        // Predicated region
        $region33: #{_fused_matmul.1} parent=31 // pred_check
          %p1962 = pneg %p127
        $region34: #{_fused_matmul.1} parent=31 // pred_check_branch
          %1964 = sbr.rel (%p1962) target = $region36
        $region35: #{_fused_matmul.1} parent=31 // pred_region
          %s1965 = smul.u32 98, %s21
          %s1967 = ssub.s32 6272, 6272
          %1968 = vsyncadd %s1958, %s1967
          %s1969 = sadd.s32 %s22, %s1965
          %s1970 = smul.addr %s1969, 64
          %s1971 = scalar_lea.hbm %s3, %s1970
          %s1972 = sshll.u32 %s1961, 4
          %s1973 = int_to_ptr.vmem [resolvable:$true] %s1972
          %1978 = dma.vmem_to_hbm [thread:$0]  %s1973, 6272, %s1971, %s1958, 64, 64, 4
        $region36: #{_fused_matmul.1} parent=31 // pred_fallthru
          _
      $region32: #{_fused_matmul.1} parent=5 // pred_fallthru
        _
      %p1979 = scmp.le.s32.totalorder 2, %s12
      // Predicated region
      $region37: #{_fused_matmul.1} parent=5 // pred_check
        %p1980 = pneg %p1979
      $region38: #{_fused_matmul.1} parent=5 // pred_check_branch
        %1982 = sbr.rel (%p1980) target = $region40
      $region39: #{_fused_matmul.1} parent=5 // pred_region
        %s1983 = ssub.s32 %s12, 2
        // Predicated region
        $region41: #{_fused_matmul.1} parent=39 // pred_check
          %p1984 = pneg %p133
        $region42: #{_fused_matmul.1} parent=39 // pred_check_branch
          %1986 = sbr.rel (%p1984) target = $region44
        $region43: #{_fused_matmul.1} parent=39 // pred_region
          %s1987 = sand.u32 %s118, 1
          %s1988 = scalar_lea.sflag [#allocation3], %s1987
          %s1989 = sand.u32 %s118, 1
          %s1990 = smul.addr %s1989, 392
          %s1991 = scalar_lea.vmem [#allocation2], %s1990
          %1992 = dma.done %s1988, 6272
        $region44: #{_fused_matmul.1} parent=39 // pred_fallthru
          _
      $region40: #{_fused_matmul.1} parent=5 // pred_fallthru
        _
    $region6: #{_fused_matmul.1} parent=1 // loop_footer
      %s16 = sadd.s32 1, %s12
    $region7: #{_fused_matmul.1} parent=1 // loop_footer_branch
      %11 = sbr.rel target = $region3
    $region8: #{_fused_matmul.1} parent=1 // loop_exit
      _
    %1993 = vsyncpa [#allocation3], 1
    %s1994 = scalar_lea.sflag [#allocation3], 1
    %1995 = vsyncpa %s1994, 1

</llo_original>
